<compile_context>
chip_gen: v7x
topology: tpu7x:2x2x1
jax: 0.10.0
libtpu: 0.0.40
codegen_flags: <defaults>
</compile_context>

<pallas_src>
import functools

import jax
import jax.numpy as jnp
from jax import lax
from jax.experimental import pallas as pl
from jax.experimental.pallas import tpu as pltpu

_VMEM_LIMIT = 32 * 1024 * 1024   # explicit scoped-VMEM budget (safe on v5e/v6e/v7x)


# ---------------------------------------------------------------------------
# Pallas kernels
# ---------------------------------------------------------------------------
def _stage_body(x_ref, scale_ref, shift_ref, dww_ref, pww_ref,
                y_ref, stats_ref, xp_ref, *,
                k, stride, padding, h_out, w_out):
    """Fused: [BN affine] -> ReLU -> depthwise conv -> 1x1 conv -> BN partial stats.

    x_ref:     (1, H, W, Cin)     input block (one batch element)
    scale_ref: (1, Cin) or None   BN scale of the previous stage
    shift_ref: (1, Cin) or None   BN shift of the previous stage
    dww_ref:   (k, k, Cin)        depthwise weights
    pww_ref:   (Cin, Cout)        1x1 (pointwise) weights
    y_ref:     (1, Ho, Wo, Cout)  stage output
    stats_ref: (1, 2, Cout)       per-block [sum, sum-of-squares] over Ho*Wo
    xp_ref:    (H+2p, W+2p, Cin)  VMEM scratch holding the zero-padded input
    """
    h, w, c_in = x_ref.shape[1], x_ref.shape[2], x_ref.shape[3]
    c_out = y_ref.shape[3]
    p = padding
    hp, wp = h + 2 * p, w + 2 * p

    x = x_ref[0].astype(jnp.float32)                       # (H, W, Cin)
    if scale_ref is not None:                              # BN of previous stage
        x = x * scale_ref[...] + shift_ref[...]
    x = jnp.maximum(x, 0.0)                                # ReLU

    # Zero-padding realized in VMEM scratch (no jnp.pad HBM pass).  Only the
    # border strips are zeroed — the interior is fully overwritten below — so
    # we avoid a full-tile memset on every grid step.
    if p > 0:
        zrow = jnp.zeros((p, wp, c_in), jnp.float32)
        xp_ref[0:p, :, :] = zrow                           # top rows
        xp_ref[h + p:hp, :, :] = zrow                      # bottom rows
        zcol = jnp.zeros((h, p, c_in), jnp.float32)
        xp_ref[p:p + h, 0:p, :] = zcol                     # left columns
        xp_ref[p:p + h, w + p:wp, :] = zcol                # right columns
    xp_ref[p:p + h, p:p + w, :] = x                        # interior

    h_full, w_full = hp - k + 1, wp - k + 1                # stride-1 output extent

    # Depthwise conv: k*k shifted taps (VPU multiply-accumulate).
    dww = dww_ref[...].astype(jnp.float32)                 # (k, k, Cin)
    acc = None
    for kh in range(k):
        for kw in range(k):
            patch = xp_ref[kh:kh + h_full, kw:kw + w_full, :]
            term = patch * dww[kh, kw, :]
            acc = term if acc is None else acc + term
    if stride > 1:
        # Single strided subsample instead of k*k strided slices.
        acc = lax.slice(acc, (0, 0, 0),
                        (stride * (h_out - 1) + 1, stride * (w_out - 1) + 1, c_in),
                        (stride, stride, 1))

    # 1x1 conv == matmul over channels (MXU).  (Hout*Wout, Cin) @ (Cin, Cout)
    flat = acc.reshape(h_out * w_out, c_in)
    y2d = jnp.dot(flat, pww_ref[...], preferred_element_type=jnp.float32)

    # Partial BN statistics of this block for the *following* BatchNorm.
    stats_ref[0, 0:1, :] = jnp.sum(y2d, axis=0, keepdims=True)
    stats_ref[0, 1:2, :] = jnp.sum(y2d * y2d, axis=0, keepdims=True)

    y_ref[0] = y2d.reshape(h_out, w_out, c_out).astype(y_ref.dtype)


def _stage1_kernel(x_ref, dww_ref, pww_ref, y_ref, stats_ref, xp_ref, **kw):
    # First SepConv half: no preceding BatchNorm.
    _stage_body(x_ref, None, None, dww_ref, pww_ref, y_ref, stats_ref, xp_ref, **kw)


def _stage2_kernel(x_ref, scale_ref, shift_ref, dww_ref, pww_ref,
                   y_ref, stats_ref, xp_ref, **kw):
    # Second SepConv half: fuse BN1 scale/shift into the same pass.
    _stage_body(x_ref, scale_ref, shift_ref, dww_ref, pww_ref,
                y_ref, stats_ref, xp_ref, **kw)


def _bn_rows_kernel(x_ref, scale_ref, shift_ref, o_ref):
    # Per-row (= per (batch, channel)) scale/shift; last dim is H*W (lane-dense).
    y = x_ref[...].astype(jnp.float32) * scale_ref[...] + shift_ref[...]
    o_ref[...] = y.astype(o_ref.dtype)


# ---------------------------------------------------------------------------
# Wrappers
# ---------------------------------------------------------------------------
def _fused_stage(x_nhwc, dw_w, pw_w, scale, shift, *, stride, padding):
    """One fused SepConv half: [BN] -> ReLU -> depthwise -> 1x1 + BN partial stats."""
    n, h, w, c_in = x_nhwc.shape
    k = dw_w.shape[0]
    c_out = pw_w.shape[1]
    hp, wp = h + 2 * padding, w + 2 * padding
    h_out = (hp - k) // stride + 1
    w_out = (wp - k) // stride + 1
    # TODO(synk): for very large spatial extents on v7x (64 MiB VMEM), add an
    # H-tile grid axis with a (k-1)-row halo instead of one full image per step.
    kw = dict(k=k, stride=stride, padding=padding, h_out=h_out, w_out=w_out)
    if scale is not None:
        kern = functools.partial(_stage2_kernel, **kw)
        extra_in = (scale, shift)
        extra_specs = [pl.BlockSpec((1, c_in), lambda i: (0, 0)),
                       pl.BlockSpec((1, c_in), lambda i: (0, 0))]
    else:
        kern = functools.partial(_stage1_kernel, **kw)
        extra_in = ()
        extra_specs = []

    y, stats = pl.pallas_call(
        kern,
        out_shape=(jax.ShapeDtypeStruct((n, h_out, w_out, c_out), x_nhwc.dtype),
                   jax.ShapeDtypeStruct((n, 2, c_out), jnp.float32)),
        grid=(n,),
        in_specs=[pl.BlockSpec((1, h, w, c_in), lambda i: (i, 0, 0, 0))]
                 + extra_specs
                 + [pl.BlockSpec((k, k, c_in), lambda i: (0, 0, 0)),
                    pl.BlockSpec((c_in, c_out), lambda i: (0, 0))],
        out_specs=(
            pl.BlockSpec((1, h_out, w_out, c_out), lambda i: (i, 0, 0, 0)),
            pl.BlockSpec((1, 2, c_out), lambda i: (i, 0, 0)),
        ),
        scratch_shapes=[pltpu.VMEM((hp, wp, c_in), jnp.float32)],
        compiler_params=pltpu.CompilerParams(
            dimension_semantics=("parallel",),
            vmem_limit_bytes=_VMEM_LIMIT),
    )(x_nhwc, *extra_in, dw_w, pw_w)
    return y, stats


def _finalize_stats(stats, count, eps):
    """Tiny glue: combine per-block [sum, sumsq] -> BN scale/shift (biased var)."""
    s = jnp.sum(stats[:, 0, :], axis=0)
    sq = jnp.sum(stats[:, 1, :], axis=0)
    mean = s / count
    var = jnp.maximum(sq / count - mean * mean, 0.0)
    scale = lax.rsqrt(var + eps)
    shift = -mean * scale
    return scale.reshape(1, -1), shift.reshape(1, -1)


def _final_bn(y_nhwc, scale, shift):
    """Final BatchNorm, lane-dense over (N*C, H*W); result is already NCHW."""
    n, h, w, c = y_nhwc.shape
    y_nchw = jnp.transpose(y_nhwc, (0, 3, 1, 2))
    rows = y_nchw.reshape(n * c, h * w)
    scale_rows = jnp.broadcast_to(scale.reshape(1, c), (n, c)).reshape(n * c, 1)
    shift_rows = jnp.broadcast_to(shift.reshape(1, c), (n, c)).reshape(n * c, 1)
    r, l = rows.shape
    tr = min(256, max(8, ((r // 2 + 7) // 8) * 8))              # >=2 tiles when possible
    tr = min(tr, max(8, (512 * 1024 // max(l, 1)) // 8 * 8))    # keep blocks VMEM-friendly
    tr = max(1, min(tr, r))
    out_rows = pl.pallas_call(
        _bn_rows_kernel,
        out_shape=jax.ShapeDtypeStruct((r, l), y_nhwc.dtype),
        grid=(pl.cdiv(r, tr),),
        in_specs=[
            pl.BlockSpec((tr, l), lambda i: (i, 0)),
            pl.BlockSpec((tr, 1), lambda i: (i, 0)),
            pl.BlockSpec((tr, 1), lambda i: (i, 0)),
        ],
        out_specs=pl.BlockSpec((tr, l), lambda i: (i, 0)),
        compiler_params=pltpu.CompilerParams(
            dimension_semantics=("parallel",),
            vmem_limit_bytes=_VMEM_LIMIT),
    )(rows, scale_rows, shift_rows)
    return out_rows.reshape(n, c, h, w)


def sep_conv_forward(x_nchw, params, *, stride, padding, eps=1e-5):
    n = x_nchw.shape[0]
    x = jnp.transpose(x_nchw, (0, 2, 3, 1))                      # NCHW -> NHWC

    # Stage 1: ReLU -> dw(stride) -> 1x1 (Cin->Cin), emits BN1 partial stats.
    y1, stats1 = _fused_stage(x, params["dw1"], params["pw1"], None, None,
                              stride=stride, padding=padding)
    _, h1, w1, _ = y1.shape
    scale1, shift1 = _finalize_stats(stats1, n * h1 * w1, eps)

    # Stage 2: BN1 -> ReLU -> dw(1) -> 1x1 (Cin->Cout), emits BN2 partial stats.
    y2, stats2 = _fused_stage(y1, params["dw2"], params["pw2"], scale1, shift1,
                              stride=1, padding=padding)
    _, h2, w2, _ = y2.shape
    scale2, shift2 = _finalize_stats(stats2, n * h2 * w2, eps)

    # Final BN2 (lane-dense); output is already NCHW.
    return _final_bn(y2, scale2, shift2)


# ---------------------------------------------------------------------------
# Parameter init (kaiming_normal_, fan_in mode, as in _initialize_weights)
# ---------------------------------------------------------------------------
def init_params(key, c_in, c_out, k):
    k1, k2, k3, k4 = jax.random.split(key, 4)
    std_dw = (2.0 / (k * k)) ** 0.5          # depthwise: fan_in = 1*k*k
    std_pw = (2.0 / c_in) ** 0.5             # pointwise: fan_in = C_in*1*1
    return {
        "dw1": std_dw * jax.random.normal(k1, (k, k, c_in), jnp.float32),
        "pw1": std_pw * jax.random.normal(k2, (c_in, c_in), jnp.float32),
        "dw2": std_dw * jax.random.normal(k3, (k, k, c_in), jnp.float32),
        "pw2": std_pw * jax.random.normal(k4, (c_in, c_out), jnp.float32),
    }


# ---------------------------------------------------------------------------
# Pure-JAX reference (sanity check against the fused Pallas pipeline)
# ---------------------------------------------------------------------------
def _ref_forward(x_nchw, params, *, stride, padding, eps=1e-5):
    x = jnp.transpose(x_nchw, (0, 2, 3, 1))
    dn = ("NHWC", "HWIO", "NHWC")

    def dw(x, w, s):
        c = x.shape[-1]
        return lax.conv_general_dilated(
            x, w[:, :, None, :], (s, s), [(padding, padding)] * 2,
            dimension_numbers=dn, feature_group_count=c)

    def pw(x, w):
        return lax.conv_general_dilated(
            x, w[None, None, :, :], (1, 1), [(0, 0), (0, 0)],
            dimension_numbers=dn)

    def bn(x):
        mu = jnp.mean(x, axis=(0, 1, 2), keepdims=True)
        var = jnp.mean((x - mu) ** 2, axis=(0, 1, 2), keepdims=True)
        return (x - mu) * lax.rsqrt(var + eps)

    x = dw(jnp.maximum(x, 0.0), params["dw1"], stride)
    x = bn(pw(x, params["pw1"]))
    x = dw(jnp.maximum(x, 0.0), params["dw2"], 1)
    x = bn(pw(x, params["pw2"]))
    return jnp.transpose(x, (0, 3, 1, 2))


if __name__ == "__main__":
    N, C_IN, C_OUT, H, W = 2, 4, 8, 16, 16
    K, STRIDE, PADDING = 3, 1, 1

    key = jax.random.PRNGKey(0)
    kx, kp = jax.random.split(key)
    x = jax.random.normal(kx, (N, C_IN, H, W), jnp.float32)     # NCHW like PyTorch
    params = init_params(kp, C_IN, C_OUT, K)

    out = sep_conv_forward(x, params, stride=STRIDE, padding=PADDING)
    out = jax.block_until_ready(out)

    h1 = (H + 2 * PADDING - K) // STRIDE + 1
    w1 = (W + 2 * PADDING - K) // STRIDE + 1
    h2 = h1 + 2 * PADDING - K + 1
    w2 = w1 + 2 * PADDING - K + 1
    assert out.shape == (N, C_OUT, h2, w2), out.shape

    ref = jax.block_until_ready(_ref_forward(x, params, stride=STRIDE, padding=PADDING))
    assert jnp.allclose(out, ref, rtol=1e-4, atol=1e-4), float(jnp.max(jnp.abs(out - ref)))

    print("KERNEL_OK")
</pallas_src>

<mosaic_0001>
module attributes {stable_mosaic.version = 11 : i64} {
  func.func @_stage1_kernel(%arg0: i32, %arg1: memref<1x16x16x4xf32, #tpu.memory_space<vmem>>, %arg2: memref<3x3x4xf32, #tpu.memory_space<vmem>>, %arg3: memref<4x4xf32, #tpu.memory_space<vmem>>, %arg4: memref<1x16x16x4xf32, #tpu.memory_space<vmem>>, %arg5: memref<1x2x4xf32, #tpu.memory_space<vmem>>, %arg6: memref<18x18x4xf32, #tpu.memory_space<vmem>>) attributes {dimension_semantics = [#tpu.dimension_semantics<parallel>], iteration_bounds = array<i64: 2>, scalar_prefetch = 0 : i64, scratch_operands = 1 : i64, tpu.core_type = #tpu.core_type<tc>, window_params = [{transform_indices = @transform_0, window_bounds = array<i64: 1, 16, 16, 4>}, {pipeline_mode = #tpu.pipeline_mode<synchronous>, transform_indices = @transform_1, window_bounds = array<i64: 3, 3, 4>}, {pipeline_mode = #tpu.pipeline_mode<synchronous>, transform_indices = @transform_2, window_bounds = array<i64: 4, 4>}, {transform_indices = @transform_3, window_bounds = array<i64: 1, 16, 16, 4>}, {transform_indices = @transform_4, window_bounds = array<i64: 1, 2, 4>}]} {
    %c0 = arith.constant 0 : index
    %c0_0 = arith.constant 0 : index
    %c0_1 = arith.constant 0 : index
    %c0_2 = arith.constant 0 : index
    %0 = vector.load %arg1[%c0, %c0_0, %c0_1, %c0_2] : memref<1x16x16x4xf32, #tpu.memory_space<vmem>>, vector<1x16x16x4xf32>
    %1 = vector.shape_cast %0 : vector<1x16x16x4xf32> to vector<16x16x4xf32>
    %cst = arith.constant 0.000000e+00 : f32
    %2 = vector.broadcast %cst : f32 to vector<16x16x4xf32>
    %3 = arith.maximumf %1, %2 : vector<16x16x4xf32>
    %cst_3 = arith.constant 0.000000e+00 : f32
    %4 = vector.broadcast %cst_3 : f32 to vector<1x18x4xf32>
    %c0_4 = arith.constant 0 : index
    %c0_5 = arith.constant 0 : index
    %c0_6 = arith.constant 0 : index
    %5 = vector.load %arg6[%c0_4, %c0_5, %c0_6] : memref<18x18x4xf32, #tpu.memory_space<vmem>>, vector<1x18x4xf32>
    tpu.vector_store %arg6[%c0_4, %c0_5, %c0_6], %4 {strides = array<i32>} : memref<18x18x4xf32, #tpu.memory_space<vmem>>, vector<1x18x4xf32>,
    %c17 = arith.constant 17 : index
    %c0_7 = arith.constant 0 : index
    %c0_8 = arith.constant 0 : index
    %6 = vector.load %arg6[%c17, %c0_7, %c0_8] : memref<18x18x4xf32, #tpu.memory_space<vmem>>, vector<1x18x4xf32>
    tpu.vector_store %arg6[%c17, %c0_7, %c0_8], %4 {strides = array<i32>} : memref<18x18x4xf32, #tpu.memory_space<vmem>>, vector<1x18x4xf32>,
    %cst_9 = arith.constant 0.000000e+00 : f32
    %7 = vector.broadcast %cst_9 : f32 to vector<16x1x4xf32>
    %c1 = arith.constant 1 : index
    %c0_10 = arith.constant 0 : index
    %c0_11 = arith.constant 0 : index
    %8 = vector.load %arg6[%c1, %c0_10, %c0_11] : memref<18x18x4xf32, #tpu.memory_space<vmem>>, vector<16x1x4xf32>
    tpu.vector_store %arg6[%c1, %c0_10, %c0_11], %7 {strides = array<i32>} : memref<18x18x4xf32, #tpu.memory_space<vmem>>, vector<16x1x4xf32>,
    %c1_12 = arith.constant 1 : index
    %c17_13 = arith.constant 17 : index
    %c0_14 = arith.constant 0 : index
    %9 = vector.load %arg6[%c1_12, %c17_13, %c0_14] : memref<18x18x4xf32, #tpu.memory_space<vmem>>, vector<16x1x4xf32>
    tpu.vector_store %arg6[%c1_12, %c17_13, %c0_14], %7 {strides = array<i32>} : memref<18x18x4xf32, #tpu.memory_space<vmem>>, vector<16x1x4xf32>,
    %c1_15 = arith.constant 1 : index
    %c1_16 = arith.constant 1 : index
    %c0_17 = arith.constant 0 : index
    %10 = vector.load %arg6[%c1_15, %c1_16, %c0_17] : memref<18x18x4xf32, #tpu.memory_space<vmem>>, vector<16x16x4xf32>
    tpu.vector_store %arg6[%c1_15, %c1_16, %c0_17], %3 {strides = array<i32>} : memref<18x18x4xf32, #tpu.memory_space<vmem>>, vector<16x16x4xf32>,
    %c0_18 = arith.constant 0 : index
    %c0_19 = arith.constant 0 : index
    %c0_20 = arith.constant 0 : index
    %11 = vector.load %arg2[%c0_18, %c0_19, %c0_20] : memref<3x3x4xf32, #tpu.memory_space<vmem>>, vector<3x3x4xf32>
    %c0_21 = arith.constant 0 : index
    %c0_22 = arith.constant 0 : index
    %c0_23 = arith.constant 0 : index
    %12 = vector.load %arg6[%c0_21, %c0_22, %c0_23] : memref<18x18x4xf32, #tpu.memory_space<vmem>>, vector<16x16x4xf32>
    %13 = vector.extract_strided_slice %11 {offsets = [0, 0, 0], sizes = [1, 1, 4], strides = [1, 1, 1]} : vector<3x3x4xf32> to vector<1x1x4xf32>
    %14 = vector.shape_cast %13 : vector<1x1x4xf32> to vector<4xf32>
    %15 = vector.shape_cast %14 : vector<4xf32> to vector<1x1x4xf32>
    %16 = vector.broadcast %15 : vector<1x1x4xf32> to vector<16x16x4xf32>
    %17 = arith.mulf %12, %16 : vector<16x16x4xf32>
    %c0_24 = arith.constant 0 : index
    %c1_25 = arith.constant 1 : index
    %c0_26 = arith.constant 0 : index
    %18 = vector.load %arg6[%c0_24, %c1_25, %c0_26] : memref<18x18x4xf32, #tpu.memory_space<vmem>>, vector<16x16x4xf32>
    %19 = vector.extract_strided_slice %11 {offsets = [0, 1, 0], sizes = [1, 1, 4], strides = [1, 1, 1]} : vector<3x3x4xf32> to vector<1x1x4xf32>
    %20 = vector.shape_cast %19 : vector<1x1x4xf32> to vector<4xf32>
    %21 = vector.shape_cast %20 : vector<4xf32> to vector<1x1x4xf32>
    %22 = vector.broadcast %21 : vector<1x1x4xf32> to vector<16x16x4xf32>
    %23 = arith.mulf %18, %22 : vector<16x16x4xf32>
    %24 = arith.addf %17, %23 : vector<16x16x4xf32>
    %c0_27 = arith.constant 0 : index
    %c2 = arith.constant 2 : index
    %c0_28 = arith.constant 0 : index
    %25 = vector.load %arg6[%c0_27, %c2, %c0_28] : memref<18x18x4xf32, #tpu.memory_space<vmem>>, vector<16x16x4xf32>
    %26 = vector.extract_strided_slice %11 {offsets = [0, 2, 0], sizes = [1, 1, 4], strides = [1, 1, 1]} : vector<3x3x4xf32> to vector<1x1x4xf32>
    %27 = vector.shape_cast %26 : vector<1x1x4xf32> to vector<4xf32>
    %28 = vector.shape_cast %27 : vector<4xf32> to vector<1x1x4xf32>
    %29 = vector.broadcast %28 : vector<1x1x4xf32> to vector<16x16x4xf32>
    %30 = arith.mulf %25, %29 : vector<16x16x4xf32>
    %31 = arith.addf %24, %30 : vector<16x16x4xf32>
    %c1_29 = arith.constant 1 : index
    %c0_30 = arith.constant 0 : index
    %c0_31 = arith.constant 0 : index
    %32 = vector.load %arg6[%c1_29, %c0_30, %c0_31] : memref<18x18x4xf32, #tpu.memory_space<vmem>>, vector<16x16x4xf32>
    %33 = vector.extract_strided_slice %11 {offsets = [1, 0, 0], sizes = [1, 1, 4], strides = [1, 1, 1]} : vector<3x3x4xf32> to vector<1x1x4xf32>
    %34 = vector.shape_cast %33 : vector<1x1x4xf32> to vector<4xf32>
    %35 = vector.shape_cast %34 : vector<4xf32> to vector<1x1x4xf32>
    %36 = vector.broadcast %35 : vector<1x1x4xf32> to vector<16x16x4xf32>
    %37 = arith.mulf %32, %36 : vector<16x16x4xf32>
    %38 = arith.addf %31, %37 : vector<16x16x4xf32>
    %c1_32 = arith.constant 1 : index
    %c1_33 = arith.constant 1 : index
    %c0_34 = arith.constant 0 : index
    %39 = vector.load %arg6[%c1_32, %c1_33, %c0_34] : memref<18x18x4xf32, #tpu.memory_space<vmem>>, vector<16x16x4xf32>
    %40 = vector.extract_strided_slice %11 {offsets = [1, 1, 0], sizes = [1, 1, 4], strides = [1, 1, 1]} : vector<3x3x4xf32> to vector<1x1x4xf32>
    %41 = vector.shape_cast %40 : vector<1x1x4xf32> to vector<4xf32>
    %42 = vector.shape_cast %41 : vector<4xf32> to vector<1x1x4xf32>
    %43 = vector.broadcast %42 : vector<1x1x4xf32> to vector<16x16x4xf32>
    %44 = arith.mulf %39, %43 : vector<16x16x4xf32>
    %45 = arith.addf %38, %44 : vector<16x16x4xf32>
    %c1_35 = arith.constant 1 : index
    %c2_36 = arith.constant 2 : index
    %c0_37 = arith.constant 0 : index
    %46 = vector.load %arg6[%c1_35, %c2_36, %c0_37] : memref<18x18x4xf32, #tpu.memory_space<vmem>>, vector<16x16x4xf32>
    %47 = vector.extract_strided_slice %11 {offsets = [1, 2, 0], sizes = [1, 1, 4], strides = [1, 1, 1]} : vector<3x3x4xf32> to vector<1x1x4xf32>
    %48 = vector.shape_cast %47 : vector<1x1x4xf32> to vector<4xf32>
    %49 = vector.shape_cast %48 : vector<4xf32> to vector<1x1x4xf32>
    %50 = vector.broadcast %49 : vector<1x1x4xf32> to vector<16x16x4xf32>
    %51 = arith.mulf %46, %50 : vector<16x16x4xf32>
    %52 = arith.addf %45, %51 : vector<16x16x4xf32>
    %c2_38 = arith.constant 2 : index
    %c0_39 = arith.constant 0 : index
    %c0_40 = arith.constant 0 : index
    %53 = vector.load %arg6[%c2_38, %c0_39, %c0_40] : memref<18x18x4xf32, #tpu.memory_space<vmem>>, vector<16x16x4xf32>
    %54 = vector.extract_strided_slice %11 {offsets = [2, 0, 0], sizes = [1, 1, 4], strides = [1, 1, 1]} : vector<3x3x4xf32> to vector<1x1x4xf32>
    %55 = vector.shape_cast %54 : vector<1x1x4xf32> to vector<4xf32>
    %56 = vector.shape_cast %55 : vector<4xf32> to vector<1x1x4xf32>
    %57 = vector.broadcast %56 : vector<1x1x4xf32> to vector<16x16x4xf32>
    %58 = arith.mulf %53, %57 : vector<16x16x4xf32>
    %59 = arith.addf %52, %58 : vector<16x16x4xf32>
    %c2_41 = arith.constant 2 : index
    %c1_42 = arith.constant 1 : index
    %c0_43 = arith.constant 0 : index
    %60 = vector.load %arg6[%c2_41, %c1_42, %c0_43] : memref<18x18x4xf32, #tpu.memory_space<vmem>>, vector<16x16x4xf32>
    %61 = vector.extract_strided_slice %11 {offsets = [2, 1, 0], sizes = [1, 1, 4], strides = [1, 1, 1]} : vector<3x3x4xf32> to vector<1x1x4xf32>
    %62 = vector.shape_cast %61 : vector<1x1x4xf32> to vector<4xf32>
    %63 = vector.shape_cast %62 : vector<4xf32> to vector<1x1x4xf32>
    %64 = vector.broadcast %63 : vector<1x1x4xf32> to vector<16x16x4xf32>
    %65 = arith.mulf %60, %64 : vector<16x16x4xf32>
    %66 = arith.addf %59, %65 : vector<16x16x4xf32>
    %c2_44 = arith.constant 2 : index
    %c2_45 = arith.constant 2 : index
    %c0_46 = arith.constant 0 : index
    %67 = vector.load %arg6[%c2_44, %c2_45, %c0_46] : memref<18x18x4xf32, #tpu.memory_space<vmem>>, vector<16x16x4xf32>
    %68 = vector.extract_strided_slice %11 {offsets = [2, 2, 0], sizes = [1, 1, 4], strides = [1, 1, 1]} : vector<3x3x4xf32> to vector<1x1x4xf32>
    %69 = vector.shape_cast %68 : vector<1x1x4xf32> to vector<4xf32>
    %70 = vector.shape_cast %69 : vector<4xf32> to vector<1x1x4xf32>
    %71 = vector.broadcast %70 : vector<1x1x4xf32> to vector<16x16x4xf32>
    %72 = arith.mulf %67, %71 : vector<16x16x4xf32>
    %73 = arith.addf %66, %72 : vector<16x16x4xf32>
    %74 = vector.shape_cast %73 : vector<16x16x4xf32> to vector<256x4xf32>
    %c0_47 = arith.constant 0 : index
    %c0_48 = arith.constant 0 : index
    %75 = vector.load %arg3[%c0_47, %c0_48] : memref<4x4xf32, #tpu.memory_space<vmem>>, vector<4x4xf32>
    %cst_49 = arith.constant dense<0.000000e+00> : vector<256x4xf32>
    %76 = tpu.matmul %74, %75, %cst_49 {dimension_numbers = #tpu.dot_dimension_numbers<[1], [0], [0], [1], [0, 0, 1, 1], [], []>} : vector<256x4xf32>, vector<4x4xf32>, vector<256x4xf32> -> vector<256x4xf32>
    %cst_50 = arith.constant dense<0.000000e+00> : vector<4xf32>
    %77 = vector.multi_reduction <add>, %76, %cst_50 [0] : vector<256x4xf32> to vector<4xf32>
    %78 = vector.shape_cast %77 : vector<4xf32> to vector<1x4xf32>
    %c0_51 = arith.constant 0 : index
    %c0_52 = arith.constant 0 : index
    %c0_53 = arith.constant 0 : index
    %79 = vector.load %arg5[%c0_51, %c0_52, %c0_53] : memref<1x2x4xf32, #tpu.memory_space<vmem>>, vector<1x1x4xf32>
    %80 = vector.shape_cast %79 : vector<1x1x4xf32> to vector<1x4xf32>
    %81 = vector.shape_cast %78 : vector<1x4xf32> to vector<1x1x4xf32>
    tpu.vector_store %arg5[%c0_51, %c0_52, %c0_53], %81 {strides = array<i32>} : memref<1x2x4xf32, #tpu.memory_space<vmem>>, vector<1x1x4xf32>,
    %82 = arith.mulf %76, %76 : vector<256x4xf32>
    %cst_54 = arith.constant dense<0.000000e+00> : vector<4xf32>
    %83 = vector.multi_reduction <add>, %82, %cst_54 [0] : vector<256x4xf32> to vector<4xf32>
    %84 = vector.shape_cast %83 : vector<4xf32> to vector<1x4xf32>
    %c0_55 = arith.constant 0 : index
    %c1_56 = arith.constant 1 : index
    %c0_57 = arith.constant 0 : index
    %85 = vector.load %arg5[%c0_55, %c1_56, %c0_57] : memref<1x2x4xf32, #tpu.memory_space<vmem>>, vector<1x1x4xf32>
    %86 = vector.shape_cast %85 : vector<1x1x4xf32> to vector<1x4xf32>
    %87 = vector.shape_cast %84 : vector<1x4xf32> to vector<1x1x4xf32>
    tpu.vector_store %arg5[%c0_55, %c1_56, %c0_57], %87 {strides = array<i32>} : memref<1x2x4xf32, #tpu.memory_space<vmem>>, vector<1x1x4xf32>,
    %88 = vector.shape_cast %76 : vector<256x4xf32> to vector<16x16x4xf32>
    %c0_58 = arith.constant 0 : index
    %c0_59 = arith.constant 0 : index
    %c0_60 = arith.constant 0 : index
    %c0_61 = arith.constant 0 : index
    %89 = vector.load %arg4[%c0_58, %c0_59, %c0_60, %c0_61] : memref<1x16x16x4xf32, #tpu.memory_space<vmem>>, vector<1x16x16x4xf32>
    %90 = vector.shape_cast %89 : vector<1x16x16x4xf32> to vector<16x16x4xf32>
    %91 = vector.shape_cast %88 : vector<16x16x4xf32> to vector<1x16x16x4xf32>
    tpu.vector_store %arg4[%c0_58, %c0_59, %c0_60, %c0_61], %91 {strides = array<i32>} : memref<1x16x16x4xf32, #tpu.memory_space<vmem>>, vector<1x16x16x4xf32>,
    return
  }
  func.func @transform_0(%arg0: i32) -> (i32, i32, i32, i32) {
    %c0_i32 = arith.constant 0 : i32
    %c0_i32_0 = arith.constant 0 : i32
    %c0_i32_1 = arith.constant 0 : i32
    %c0_i32_2 = arith.constant 0 : i32
    return %arg0, %c0_i32, %c0_i32_0, %c0_i32_1 : i32, i32, i32, i32
  }
  func.func @transform_1(%arg0: i32) -> (i32, i32, i32) {
    %c0_i32 = arith.constant 0 : i32
    %c0_i32_0 = arith.constant 0 : i32
    %c0_i32_1 = arith.constant 0 : i32
    %c0_i32_2 = arith.constant 0 : i32
    return %c0_i32, %c0_i32_0, %c0_i32_1 : i32, i32, i32
  }
  func.func @transform_2(%arg0: i32) -> (i32, i32) {
    %c0_i32 = arith.constant 0 : i32
    %c0_i32_0 = arith.constant 0 : i32
    %c0_i32_1 = arith.constant 0 : i32
    return %c0_i32, %c0_i32_0 : i32, i32
  }
  func.func @transform_3(%arg0: i32) -> (i32, i32, i32, i32) {
    %c0_i32 = arith.constant 0 : i32
    %c0_i32_0 = arith.constant 0 : i32
    %c0_i32_1 = arith.constant 0 : i32
    %c0_i32_2 = arith.constant 0 : i32
    return %arg0, %c0_i32, %c0_i32_0, %c0_i32_1 : i32, i32, i32, i32
  }
  func.func @transform_4(%arg0: i32) -> (i32, i32, i32) {
    %c0_i32 = arith.constant 0 : i32
    %c0_i32_0 = arith.constant 0 : i32
    %c0_i32_1 = arith.constant 0 : i32
    return %arg0, %c0_i32, %c0_i32_0 : i32, i32, i32
  }
}

</mosaic_0001>

<llo_original>
// kernel: tpu_custom_call.1
$region0: #{tpu_custom_call.1}
  #allocation0 [shape = 'u32[]', space=smem, size = 0x4, offset = 0x4, fixed_abs, tag = 'smem constant byte address 0x4 - core index']
  #allocation1 [shape = 'u32[144,128]{1,0:T(1,128)}', space=vmem, size = 0x12000, scoped, tag = 'internal scratch']
  #allocation2 [shape = 'f32[18,18,4]{2,1,0:T(8,128)}', space=vmem, size = 0x36000, scoped, tag = 'scratch operand']
  %s0 = inlined_call_operand.vmem [shape: f32[2,16,16,4], index: 0, kind: input, shape index: {}]
  %s1 = inlined_call_operand.vmem [shape: f32[3,3,4], index: 1, kind: input, shape index: {}]
  %s2 = inlined_call_operand.vmem [shape: f32[4,4], index: 2, kind: input, shape index: {}]
  %s3 = inlined_call_operand.vmem [shape: f32[2,16,16,4], index: 3, kind: output, shape index: {0}]
  %s4 = inlined_call_operand.hbm [shape: f32[2,2,4], index: 4, kind: output, shape index: {1}]
  %5 = xla_tuple %s3, %s4
  %s6 = sld [smem:[#allocation0]]
  $region53: #{tpu_custom_call.1} parent=0
    _
  %s8 = ssub.s32 1, %s6
  %s9 = scalar_select 0, %s8, %s6
  $region1: #{tpu_custom_call.1} parent=0
    #allocation3 [shape = 'u8[2048]{0}', space=vmem, size = 0x800, scoped, tag = 'output window, operand 1']
    #allocation4 [shape = 's32[2]{0}', space=sflag, size = 0x8, scoped, tag = 'scoped memory for tpu_custom_call.1']
    %10 = vsyncpa [#allocation4], 0
    %s11 = scalar_lea.sflag [#allocation4], 1
    %12 = vsyncpa %s11, 0
    loop: start=0, step=1, limit=4
    $region2: #{tpu_custom_call.1} parent=1 // loop_pre_header
      _
    $region3: #{tpu_custom_call.1} parent=1 // loop_header
      %s14 = sphi 0, %s18
      %p15 = scmp.ge.s32.totalorder %s14, 4
      %s24 = sphi 0, %s26
      %s27 = sphi 0, %s24
      %s28 = sphi 0, %s27
      %s44 = sphi 0, %s28
      %s48 = sphi 0, %s48
      %s50 = sphi 0, %s48
      %s51 = sphi 0, %s50
      %s65 = sphi 0, %s51
      %s69 = sphi 0, %s69
      %s71 = sphi 0, %s69
      %s72 = sphi 0, %s71
      %s86 = sphi 0, %s72
      %s92 = sphi 0, %s94
      %s95 = sphi 0, %s92
      %s96 = sphi 0, %s95
      %s112 = sphi 0, %s96
      %s118 = sphi 0, %s120
      %s121 = sphi 0, %s118
      %s122 = sphi 0, %s121
      %s138 = sphi 0, %s122
    $region4: #{tpu_custom_call.1} parent=1 // loop_header_branch
      %17 = sbr.rel (%p15) target = $region8
    $region5: #{tpu_custom_call.1} parent=1 // loop_body
      %s19 = ssub.s32 %s14, 1
      %s20 = ssub.s32 %s14, 2
      %s21 = sadd.s32 %s14, 1
      %s22 = ssub.s32 %s14, %s21
      %p23 = scmp.eq.s32.totalorder %s22, 0
      %s25 = sadd.s32 %s24, 1
      %s26 = scalar_select %p23, %s24, %s25
      %p29 = pneg %p23
      %p30 = scmp.eq.s32.totalorder %s14, 1
      %p31 = por %p29, %p30
      %p32 = scmp.ne.s32.totalorder %s24, %s27
      %p33 = scmp.eq.s32.totalorder %s14, 0
      %p34 = por %p32, %p33
      %p35 = scmp.ne.s32.totalorder %s24, %s27
      %p36 = scmp.eq.s32.totalorder %s19, 1
      %p37 = por %p35, %p36
      %p38 = scmp.ne.s32.totalorder %s27, %s28
      %p39 = scmp.eq.s32.totalorder %s19, 0
      %p40 = por %p38, %p39
      %p41 = scmp.ne.s32.totalorder %s27, %s28
      %p42 = scmp.eq.s32.totalorder %s20, 1
      %p43 = por %p41, %p42
      %p45 = scmp.ne.s32.totalorder %s28, %s44
      %p46 = scmp.eq.s32.totalorder %s20, 0
      %p47 = por %p45, %p46
      %s49 = sadd.s32 %s48, 1
      %p52 = scmp.eq.s32.totalorder %s14, 1
      %p53 = scmp.ne.s32.totalorder %s48, %s50
      %p54 = scmp.eq.s32.totalorder %s14, 0
      %p55 = por %p53, %p54
      %p56 = scmp.ne.s32.totalorder %s48, %s50
      %p57 = scmp.eq.s32.totalorder %s19, 1
      %p58 = por %p56, %p57
      %p59 = scmp.ne.s32.totalorder %s50, %s51
      %p60 = scmp.eq.s32.totalorder %s19, 0
      %p61 = por %p59, %p60
      %p62 = scmp.ne.s32.totalorder %s50, %s51
      %p63 = scmp.eq.s32.totalorder %s20, 1
      %p64 = por %p62, %p63
      %p66 = scmp.ne.s32.totalorder %s51, %s65
      %p67 = scmp.eq.s32.totalorder %s20, 0
      %p68 = por %p66, %p67
      %s70 = sadd.s32 %s69, 1
      %p73 = scmp.eq.s32.totalorder %s14, 1
      %p74 = scmp.ne.s32.totalorder %s69, %s71
      %p75 = scmp.eq.s32.totalorder %s14, 0
      %p76 = por %p74, %p75
      %p77 = scmp.ne.s32.totalorder %s69, %s71
      %p78 = scmp.eq.s32.totalorder %s19, 1
      %p79 = por %p77, %p78
      %p80 = scmp.ne.s32.totalorder %s71, %s72
      %p81 = scmp.eq.s32.totalorder %s19, 0
      %p82 = por %p80, %p81
      %p83 = scmp.ne.s32.totalorder %s71, %s72
      %p84 = scmp.eq.s32.totalorder %s20, 1
      %p85 = por %p83, %p84
      %p87 = scmp.ne.s32.totalorder %s72, %s86
      %p88 = scmp.eq.s32.totalorder %s20, 0
      %p89 = por %p87, %p88
      %s90 = ssub.s32 %s14, %s21
      %p91 = scmp.eq.s32.totalorder %s90, 0
      %s93 = sadd.s32 %s92, 1
      %s94 = scalar_select %p91, %s92, %s93
      %p97 = pneg %p91
      %p98 = scmp.eq.s32.totalorder %s14, 1
      %p99 = por %p97, %p98
      %p100 = scmp.ne.s32.totalorder %s92, %s95
      %p101 = scmp.eq.s32.totalorder %s14, 0
      %p102 = por %p100, %p101
      %p103 = scmp.ne.s32.totalorder %s92, %s95
      %p104 = scmp.eq.s32.totalorder %s19, 1
      %p105 = por %p103, %p104
      %p106 = scmp.ne.s32.totalorder %s95, %s96
      %p107 = scmp.eq.s32.totalorder %s19, 0
      %p108 = por %p106, %p107
      %p109 = scmp.ne.s32.totalorder %s95, %s96
      %p110 = scmp.eq.s32.totalorder %s20, 1
      %p111 = por %p109, %p110
      %p113 = scmp.ne.s32.totalorder %s96, %s112
      %p114 = scmp.eq.s32.totalorder %s20, 0
      %p115 = por %p113, %p114
      %s116 = ssub.s32 %s14, %s21
      %p117 = scmp.eq.s32.totalorder %s116, 0
      %s119 = sadd.s32 %s118, 1
      %s120 = scalar_select %p117, %s118, %s119
      %p123 = pneg %p117
      %p124 = scmp.eq.s32.totalorder %s14, 1
      %p125 = por %p123, %p124
      %p126 = scmp.ne.s32.totalorder %s118, %s121
      %p127 = scmp.eq.s32.totalorder %s14, 0
      %p128 = por %p126, %p127
      %p129 = scmp.ne.s32.totalorder %s118, %s121
      %p130 = scmp.eq.s32.totalorder %s19, 1
      %p131 = por %p129, %p130
      %p132 = scmp.ne.s32.totalorder %s121, %s122
      %p133 = scmp.eq.s32.totalorder %s19, 0
      %p134 = por %p132, %p133
      %p135 = scmp.ne.s32.totalorder %s121, %s122
      %p136 = scmp.eq.s32.totalorder %s20, 1
      %p137 = por %p135, %p136
      %p139 = scmp.ne.s32.totalorder %s122, %s138
      %p140 = scmp.eq.s32.totalorder %s20, 0
      %p141 = por %p139, %p140
      %p142 = scmp.le.s32.totalorder 1, %s14
      %p143 = scmp.lt.s32.totalorder %s14, 3
      %p144 = pnand %p142, %p143
      %p145 = pneg %p144
      // Predicated region
      $region9: #{tpu_custom_call.1} parent=5 // pred_check
        _
      $region10: #{tpu_custom_call.1} parent=5 // pred_check_branch
        %147 = sbr.rel (%p144) target = $region12
      $region11: #{tpu_custom_call.1} parent=5 // pred_region
        %s148 = ssub.s32 %s14, 1
        // Predicated region
        $region13: #{tpu_custom_call.1} parent=11 // pred_check
          %p149 = pneg %p61
        $region14: #{tpu_custom_call.1} parent=11 // pred_check_branch
          %151 = sbr.rel (%p149) target = $region16
        $region15: #{tpu_custom_call.1} parent=11 // pred_region
          _
        $region16: #{tpu_custom_call.1} parent=11 // pred_fallthru
          _
        // Predicated region
        $region17: #{tpu_custom_call.1} parent=11 // pred_check
          %p152 = pneg %p82
        $region18: #{tpu_custom_call.1} parent=11 // pred_check_branch
          %154 = sbr.rel (%p152) target = $region20
        $region19: #{tpu_custom_call.1} parent=11 // pred_region
          _
        $region20: #{tpu_custom_call.1} parent=11 // pred_fallthru
          _
      $region12: #{tpu_custom_call.1} parent=5 // pred_fallthru
        _
      %p155 = scmp.lt.s32.totalorder %s14, 2
      // Predicated region
      $region21: #{tpu_custom_call.1} parent=5 // pred_check
        %p156 = pneg %p155
      $region22: #{tpu_custom_call.1} parent=5 // pred_check_branch
        %158 = sbr.rel (%p156) target = $region24
      $region23: #{tpu_custom_call.1} parent=5 // pred_region
        // Predicated region
        $region25: #{tpu_custom_call.1} parent=23 // pred_check
          %p159 = pneg %p34
        $region26: #{tpu_custom_call.1} parent=23 // pred_check_branch
          %161 = sbr.rel (%p159) target = $region28
        $region27: #{tpu_custom_call.1} parent=23 // pred_region
          %p162 = scmp.lt.s32.totalorder %s14, 1
          %s163 = scalar_select %p162, %s14, 1
          %s164 = smul.addr %s163, 32
          %s165 = smul.addr %s164, 8
          %s166 = scalar_lea.vmem %s0, %s165
        $region28: #{tpu_custom_call.1} parent=23 // pred_fallthru
          _
      $region24: #{tpu_custom_call.1} parent=5 // pred_fallthru
        _
      %p167 = scmp.le.s32.totalorder 1, %s14
      %p168 = scmp.lt.s32.totalorder %s14, 3
      %p169 = pnand %p167, %p168
      %p170 = pneg %p169
      // Predicated region
      $region29: #{tpu_custom_call.1} parent=5 // pred_check
        _
      $region30: #{tpu_custom_call.1} parent=5 // pred_check_branch
        %172 = sbr.rel (%p169) target = $region32
      $region31: #{tpu_custom_call.1} parent=5 // pred_region
        %s173 = ssub.s32 %s14, 1
        %p174 = scmp.lt.s32.totalorder %s19, 1
        %s175 = scalar_select %p174, %s19, 1
        %s176 = smul.addr %s175, 32
        %s177 = smul.addr %s176, 8
        %s178 = scalar_lea.vmem %s0, %s177
        %p179 = pneg %p40
        %p180 = pneg %p37
        %p181 = pneg %p61
        %p182 = pneg %p58
        %p183 = pneg %p82
        %p184 = pneg %p79
        %p185 = pneg %p108
        %p186 = pneg %p105
        %p187 = scmp.lt.s32.totalorder %s19, 1
        %s188 = scalar_select %p187, %s19, 1
        %s189 = smul.addr %s188, 32
        %s190 = smul.addr %s189, 8
        %s191 = scalar_lea.vmem %s3, %s190
        %p192 = pneg %p134
        %p193 = pneg %p131
        %s194 = sand.u32 %s121, 1
        %s195 = scalar_lea.sflag [#allocation4], %s194
        %s196 = sand.u32 %s121, 1
        %s197 = smul.addr %s196, 2
        %s198 = scalar_lea.vmem [#allocation3], %s197
        %p199 = scmp.lt.s32.totalorder %s19, 1
        %s200 = scalar_select %p199, %s19, 1
        %s201 = smul.addr %s200, 32
        %s202 = smul.addr %s201, 8
        %s203 = scalar_lea.vmem %s0, %s202
        %p204 = scmp.lt.s32.totalorder %s19, 1
        %s205 = scalar_select %p204, %s19, 1
        %s206 = smul.addr %s205, 32
        %s207 = smul.addr %s206, 8
        %s208 = scalar_lea.vmem %s3, %s207
        %v209 = vld [vmem:[%s203] sm:$0xff]
        %v210 = vld [vmem:[%s203 + $0x8] sm:$0xff]
        %v211 = vld [vmem:[%s203 + $0x10] sm:$0xff]
        %v212 = vld [vmem:[%s203 + $0x18] sm:$0xff]
        %v213 = vld [vmem:[%s203 + $0x20] sm:$0xff]
        %v214 = vld [vmem:[%s203 + $0x28] sm:$0xff]
        %v215 = vld [vmem:[%s203 + $0x30] sm:$0xff]
        %v216 = vld [vmem:[%s203 + $0x38] sm:$0xff]
        %v217 = vld [vmem:[%s203 + $0x40] sm:$0xff]
        %v218 = vld [vmem:[%s203 + $0x48] sm:$0xff]
        %v219 = vld [vmem:[%s203 + $0x50] sm:$0xff]
        %v220 = vld [vmem:[%s203 + $0x58] sm:$0xff]
        %v221 = vld [vmem:[%s203 + $0x60] sm:$0xff]
        %v222 = vld [vmem:[%s203 + $0x68] sm:$0xff]
        %v223 = vld [vmem:[%s203 + $0x70] sm:$0xff]
        %v224 = vld [vmem:[%s203 + $0x78] sm:$0xff]
        %v225 = vld [vmem:[%s203 + $0x80] sm:$0xff]
        %v226 = vld [vmem:[%s203 + $0x88] sm:$0xff]
        %v227 = vld [vmem:[%s203 + $0x90] sm:$0xff]
        %v228 = vld [vmem:[%s203 + $0x98] sm:$0xff]
        %v229 = vld [vmem:[%s203 + $0xa0] sm:$0xff]
        %v230 = vld [vmem:[%s203 + $0xa8] sm:$0xff]
        %v231 = vld [vmem:[%s203 + $0xb0] sm:$0xff]
        %v232 = vld [vmem:[%s203 + $0xb8] sm:$0xff]
        %v233 = vld [vmem:[%s203 + $0xc0] sm:$0xff]
        %v234 = vld [vmem:[%s203 + $0xc8] sm:$0xff]
        %v235 = vld [vmem:[%s203 + $0xd0] sm:$0xff]
        %v236 = vld [vmem:[%s203 + $0xd8] sm:$0xff]
        %v237 = vld [vmem:[%s203 + $0xe0] sm:$0xff]
        %v238 = vld [vmem:[%s203 + $0xe8] sm:$0xff]
        %v239 = vld [vmem:[%s203 + $0xf0] sm:$0xff]
        %v240 = vld [vmem:[%s203 + $0xf8] sm:$0xff]
        %v241 = vmax.f32 %v209, 0.0
        %v242 = vmax.f32 %v210, 0.0
        %v243 = vmax.f32 %v211, 0.0
        %v244 = vmax.f32 %v212, 0.0
        %v245 = vmax.f32 %v213, 0.0
        %v246 = vmax.f32 %v214, 0.0
        %v247 = vmax.f32 %v215, 0.0
        %v248 = vmax.f32 %v216, 0.0
        %v249 = vmax.f32 %v217, 0.0
        %v250 = vmax.f32 %v218, 0.0
        %v251 = vmax.f32 %v219, 0.0
        %v252 = vmax.f32 %v220, 0.0
        %v253 = vmax.f32 %v221, 0.0
        %v254 = vmax.f32 %v222, 0.0
        %v255 = vmax.f32 %v223, 0.0
        %v256 = vmax.f32 %v224, 0.0
        %v257 = vmax.f32 %v225, 0.0
        %v258 = vmax.f32 %v226, 0.0
        %v259 = vmax.f32 %v227, 0.0
        %v260 = vmax.f32 %v228, 0.0
        %v261 = vmax.f32 %v229, 0.0
        %v262 = vmax.f32 %v230, 0.0
        %v263 = vmax.f32 %v231, 0.0
        %v264 = vmax.f32 %v232, 0.0
        %v265 = vmax.f32 %v233, 0.0
        %v266 = vmax.f32 %v234, 0.0
        %v267 = vmax.f32 %v235, 0.0
        %v268 = vmax.f32 %v236, 0.0
        %v269 = vmax.f32 %v237, 0.0
        %v270 = vmax.f32 %v238, 0.0
        %v271 = vmax.f32 %v239, 0.0
        %v272 = vmax.f32 %v240, 0.0
        %vm273 = vcmask 31744
        %274 = vst.msk [vmem:[#allocation2] sm:$0xff] %vm273, 0.0
        %275 = vst.msk [vmem:[#allocation2 + $0x8] sm:$0xff] %vm273, 0.0
        %vm276 = vcmask 25600
        %277 = vst.msk [vmem:[#allocation2 + $0x10] sm:$0x3] %vm276, 0.0
        %s278 = scalar_lea.vmem [#allocation2], 408
        %279 = vst.msk [vmem:[%s278] sm:$0xff] %vm273, 0.0
        %280 = vst.msk [vmem:[%s278 + $0x8] sm:$0xff] %vm273, 0.0
        %281 = vst.msk [vmem:[%s278 + $0x10] sm:$0x3] %vm276, 0.0
        %s282 = scalar_lea.vmem [#allocation2], 24
        %vm283 = vcmask 24576
        %284 = vst.msk [vmem:[%s282] sm:$0x1] %vm283, 0.0
        %285 = vst.msk [vmem:[%s282 + $0x18] sm:$0x1] %vm283, 0.0
        %286 = vst.msk [vmem:[%s282 + $0x30] sm:$0x1] %vm283, 0.0
        %287 = vst.msk [vmem:[%s282 + $0x48] sm:$0x1] %vm283, 0.0
        %288 = vst.msk [vmem:[%s282 + $0x60] sm:$0x1] %vm283, 0.0
        %289 = vst.msk [vmem:[%s282 + $0x78] sm:$0x1] %vm283, 0.0
        %290 = vst.msk [vmem:[%s282 + $0x90] sm:$0x1] %vm283, 0.0
        %291 = vst.msk [vmem:[%s282 + $0xa8] sm:$0x1] %vm283, 0.0
        %292 = vst.msk [vmem:[%s282 + $0xc0] sm:$0x1] %vm283, 0.0
        %293 = vst.msk [vmem:[%s282 + $0xd8] sm:$0x1] %vm283, 0.0
        %294 = vst.msk [vmem:[%s282 + $0xf0] sm:$0x1] %vm283, 0.0
        %295 = vst.msk [vmem:[%s282 + $0x108] sm:$0x1] %vm283, 0.0
        %296 = vst.msk [vmem:[%s282 + $0x120] sm:$0x1] %vm283, 0.0
        %297 = vst.msk [vmem:[%s282 + $0x138] sm:$0x1] %vm283, 0.0
        %298 = vst.msk [vmem:[%s282 + $0x150] sm:$0x1] %vm283, 0.0
        %299 = vst.msk [vmem:[%s282 + $0x168] sm:$0x1] %vm283, 0.0
        %300 = vst.msk [vmem:[%s282 + $0x11] sm:$0x1] %vm283, 0.0
        %301 = vst.msk [vmem:[%s282 + $0x29] sm:$0x1] %vm283, 0.0
        %302 = vst.msk [vmem:[%s282 + $0x41] sm:$0x1] %vm283, 0.0
        %303 = vst.msk [vmem:[%s282 + $0x59] sm:$0x1] %vm283, 0.0
        %304 = vst.msk [vmem:[%s282 + $0x71] sm:$0x1] %vm283, 0.0
        %305 = vst.msk [vmem:[%s282 + $0x89] sm:$0x1] %vm283, 0.0
        %306 = vst.msk [vmem:[%s282 + $0xa1] sm:$0x1] %vm283, 0.0
        %307 = vst.msk [vmem:[%s282 + $0xb9] sm:$0x1] %vm283, 0.0
        %308 = vst.msk [vmem:[%s282 + $0xd1] sm:$0x1] %vm283, 0.0
        %309 = vst.msk [vmem:[%s282 + $0xe9] sm:$0x1] %vm283, 0.0
        %310 = vst.msk [vmem:[%s282 + $0x101] sm:$0x1] %vm283, 0.0
        %311 = vst.msk [vmem:[%s282 + $0x119] sm:$0x1] %vm283, 0.0
        %312 = vst.msk [vmem:[%s282 + $0x131] sm:$0x1] %vm283, 0.0
        %313 = vst.msk [vmem:[%s282 + $0x149] sm:$0x1] %vm283, 0.0
        %314 = vst.msk [vmem:[%s282 + $0x161] sm:$0x1] %vm283, 0.0
        %315 = vst.msk [vmem:[%s282 + $0x179] sm:$0x1] %vm283, 0.0
        %316 = vst.msk [vmem:[%s282 + $0x1] sm:$0xff] %vm273, %v241
        %317 = vst.msk [vmem:[%s282 + $0x9] sm:$0xff] %vm273, %v242
        %318 = vst.msk [vmem:[%s282 + $0x19] sm:$0xff] %vm273, %v243
        %319 = vst.msk [vmem:[%s282 + $0x21] sm:$0xff] %vm273, %v244
        %320 = vst.msk [vmem:[%s282 + $0x31] sm:$0xff] %vm273, %v245
        %321 = vst.msk [vmem:[%s282 + $0x39] sm:$0xff] %vm273, %v246
        %322 = vst.msk [vmem:[%s282 + $0x49] sm:$0xff] %vm273, %v247
        %323 = vst.msk [vmem:[%s282 + $0x51] sm:$0xff] %vm273, %v248
        %324 = vst.msk [vmem:[%s282 + $0x61] sm:$0xff] %vm273, %v249
        %325 = vst.msk [vmem:[%s282 + $0x69] sm:$0xff] %vm273, %v250
        %326 = vst.msk [vmem:[%s282 + $0x79] sm:$0xff] %vm273, %v251
        %327 = vst.msk [vmem:[%s282 + $0x81] sm:$0xff] %vm273, %v252
        %328 = vst.msk [vmem:[%s282 + $0x91] sm:$0xff] %vm273, %v253
        %329 = vst.msk [vmem:[%s282 + $0x99] sm:$0xff] %vm273, %v254
        %330 = vst.msk [vmem:[%s282 + $0xa9] sm:$0xff] %vm273, %v255
        %331 = vst.msk [vmem:[%s282 + $0xb1] sm:$0xff] %vm273, %v256
        %332 = vst.msk [vmem:[%s282 + $0xc1] sm:$0xff] %vm273, %v257
        %333 = vst.msk [vmem:[%s282 + $0xc9] sm:$0xff] %vm273, %v258
        %334 = vst.msk [vmem:[%s282 + $0xd9] sm:$0xff] %vm273, %v259
        %335 = vst.msk [vmem:[%s282 + $0xe1] sm:$0xff] %vm273, %v260
        %336 = vst.msk [vmem:[%s282 + $0xf1] sm:$0xff] %vm273, %v261
        %337 = vst.msk [vmem:[%s282 + $0xf9] sm:$0xff] %vm273, %v262
        %338 = vst.msk [vmem:[%s282 + $0x109] sm:$0xff] %vm273, %v263
        %339 = vst.msk [vmem:[%s282 + $0x111] sm:$0xff] %vm273, %v264
        %340 = vst.msk [vmem:[%s282 + $0x121] sm:$0xff] %vm273, %v265
        %341 = vst.msk [vmem:[%s282 + $0x129] sm:$0xff] %vm273, %v266
        %342 = vst.msk [vmem:[%s282 + $0x139] sm:$0xff] %vm273, %v267
        %343 = vst.msk [vmem:[%s282 + $0x141] sm:$0xff] %vm273, %v268
        %344 = vst.msk [vmem:[%s282 + $0x151] sm:$0xff] %vm273, %v269
        %345 = vst.msk [vmem:[%s282 + $0x159] sm:$0xff] %vm273, %v270
        %346 = vst.msk [vmem:[%s282 + $0x169] sm:$0xff] %vm273, %v271
        %347 = vst.msk [vmem:[%s282 + $0x171] sm:$0xff] %vm273, %v272
        %v348 = vld [vmem:[%s1] sm:$0x7]
        %v349 = vld [vmem:[%s1 + $0x4] sm:$0x7]
        %v350 = vld [vmem:[%s1 + $0x8] sm:$0x7]
        %v351 = vld [vmem:[#allocation2] sm:$0xff]
        %v352 = vld [vmem:[#allocation2 + $0x8] sm:$0xff]
        %v353 = vld [vmem:[#allocation2 + $0x18] sm:$0xff]
        %v354 = vld [vmem:[#allocation2 + $0x20] sm:$0xff]
        %v355 = vld [vmem:[#allocation2 + $0x30] sm:$0xff]
        %v356 = vld [vmem:[#allocation2 + $0x38] sm:$0xff]
        %v357 = vld [vmem:[#allocation2 + $0x48] sm:$0xff]
        %v358 = vld [vmem:[#allocation2 + $0x50] sm:$0xff]
        %v359 = vld [vmem:[#allocation2 + $0x60] sm:$0xff]
        %v360 = vld [vmem:[#allocation2 + $0x68] sm:$0xff]
        %v361 = vld [vmem:[#allocation2 + $0x78] sm:$0xff]
        %v362 = vld [vmem:[#allocation2 + $0x80] sm:$0xff]
        %v363 = vld [vmem:[#allocation2 + $0x90] sm:$0xff]
        %v364 = vld [vmem:[#allocation2 + $0x98] sm:$0xff]
        %v365 = vld [vmem:[#allocation2 + $0xa8] sm:$0xff]
        %v366 = vld [vmem:[#allocation2 + $0xb0] sm:$0xff]
        %v367 = vld [vmem:[#allocation2 + $0xc0] sm:$0xff]
        %v368 = vld [vmem:[#allocation2 + $0xc8] sm:$0xff]
        %v369 = vld [vmem:[#allocation2 + $0xd8] sm:$0xff]
        %v370 = vld [vmem:[#allocation2 + $0xe0] sm:$0xff]
        %v371 = vld [vmem:[#allocation2 + $0xf0] sm:$0xff]
        %v372 = vld [vmem:[#allocation2 + $0xf8] sm:$0xff]
        %v373 = vld [vmem:[#allocation2 + $0x108] sm:$0xff]
        %v374 = vld [vmem:[#allocation2 + $0x110] sm:$0xff]
        %v375 = vld [vmem:[#allocation2 + $0x120] sm:$0xff]
        %v376 = vld [vmem:[#allocation2 + $0x128] sm:$0xff]
        %v377 = vld [vmem:[#allocation2 + $0x138] sm:$0xff]
        %v378 = vld [vmem:[#allocation2 + $0x140] sm:$0xff]
        %v379 = vld [vmem:[#allocation2 + $0x150] sm:$0xff]
        %v380 = vld [vmem:[#allocation2 + $0x158] sm:$0xff]
        %v381 = vld [vmem:[#allocation2 + $0x168] sm:$0xff]
        %v382 = vld [vmem:[#allocation2 + $0x170] sm:$0xff]
        %v383 = vlaneseq
        %v384 = vshrl.u32 %v383, 7
        %v385 = vsub.s32 0, %v384
        %v386 = vrot.slane %v348, %v385
        %v387 = vmul.f32 %v351, %v386
        %v388 = vmul.f32 %v352, %v386
        %v389 = vmul.f32 %v353, %v386
        %v390 = vmul.f32 %v354, %v386
        %v391 = vmul.f32 %v355, %v386
        %v392 = vmul.f32 %v356, %v386
        %v393 = vmul.f32 %v357, %v386
        %v394 = vmul.f32 %v358, %v386
        %v395 = vmul.f32 %v359, %v386
        %v396 = vmul.f32 %v360, %v386
        %v397 = vmul.f32 %v361, %v386
        %v398 = vmul.f32 %v362, %v386
        %v399 = vmul.f32 %v363, %v386
        %v400 = vmul.f32 %v364, %v386
        %v401 = vmul.f32 %v365, %v386
        %v402 = vmul.f32 %v366, %v386
        %v403 = vmul.f32 %v367, %v386
        %v404 = vmul.f32 %v368, %v386
        %v405 = vmul.f32 %v369, %v386
        %v406 = vmul.f32 %v370, %v386
        %v407 = vmul.f32 %v371, %v386
        %v408 = vmul.f32 %v372, %v386
        %v409 = vmul.f32 %v373, %v386
        %v410 = vmul.f32 %v374, %v386
        %v411 = vmul.f32 %v375, %v386
        %v412 = vmul.f32 %v376, %v386
        %v413 = vmul.f32 %v377, %v386
        %v414 = vmul.f32 %v378, %v386
        %v415 = vmul.f32 %v379, %v386
        %v416 = vmul.f32 %v380, %v386
        %v417 = vmul.f32 %v381, %v386
        %v418 = vmul.f32 %v382, %v386
        %v419 = vld [vmem:[#allocation2 + $0x1] sm:$0xff]
        %v420 = vld [vmem:[#allocation2 + $0x9] sm:$0xff]
        %v421 = vld [vmem:[#allocation2 + $0x19] sm:$0xff]
        %v422 = vld [vmem:[#allocation2 + $0x21] sm:$0xff]
        %v423 = vld [vmem:[#allocation2 + $0x31] sm:$0xff]
        %v424 = vld [vmem:[#allocation2 + $0x39] sm:$0xff]
        %v425 = vld [vmem:[#allocation2 + $0x49] sm:$0xff]
        %v426 = vld [vmem:[#allocation2 + $0x51] sm:$0xff]
        %v427 = vld [vmem:[#allocation2 + $0x61] sm:$0xff]
        %v428 = vld [vmem:[#allocation2 + $0x69] sm:$0xff]
        %v429 = vld [vmem:[#allocation2 + $0x79] sm:$0xff]
        %v430 = vld [vmem:[#allocation2 + $0x81] sm:$0xff]
        %v431 = vld [vmem:[#allocation2 + $0x91] sm:$0xff]
        %v432 = vld [vmem:[#allocation2 + $0x99] sm:$0xff]
        %v433 = vld [vmem:[#allocation2 + $0xa9] sm:$0xff]
        %v434 = vld [vmem:[#allocation2 + $0xb1] sm:$0xff]
        %v435 = vld [vmem:[#allocation2 + $0xc1] sm:$0xff]
        %v436 = vld [vmem:[#allocation2 + $0xc9] sm:$0xff]
        %v437 = vld [vmem:[#allocation2 + $0xd9] sm:$0xff]
        %v438 = vld [vmem:[#allocation2 + $0xe1] sm:$0xff]
        %v439 = vld [vmem:[#allocation2 + $0xf1] sm:$0xff]
        %v440 = vld [vmem:[#allocation2 + $0xf9] sm:$0xff]
        %v441 = vld [vmem:[#allocation2 + $0x109] sm:$0xff]
        %v442 = vld [vmem:[#allocation2 + $0x111] sm:$0xff]
        %v443 = vld [vmem:[#allocation2 + $0x121] sm:$0xff]
        %v444 = vld [vmem:[#allocation2 + $0x129] sm:$0xff]
        %v445 = vld [vmem:[#allocation2 + $0x139] sm:$0xff]
        %v446 = vld [vmem:[#allocation2 + $0x141] sm:$0xff]
        %v447 = vld [vmem:[#allocation2 + $0x151] sm:$0xff]
        %v448 = vld [vmem:[#allocation2 + $0x159] sm:$0xff]
        %v449 = vld [vmem:[#allocation2 + $0x169] sm:$0xff]
        %v450 = vld [vmem:[#allocation2 + $0x171] sm:$0xff]
        %v451 = vlaneseq
        %v452 = vshrl.u32 %v451, 7
        %v453 = vsub.s32 1, %v452
        %v454 = vrot.slane %v348, %v453
        %v455 = vmul.f32 %v419, %v454
        %v456 = vmul.f32 %v420, %v454
        %v457 = vmul.f32 %v421, %v454
        %v458 = vmul.f32 %v422, %v454
        %v459 = vmul.f32 %v423, %v454
        %v460 = vmul.f32 %v424, %v454
        %v461 = vmul.f32 %v425, %v454
        %v462 = vmul.f32 %v426, %v454
        %v463 = vmul.f32 %v427, %v454
        %v464 = vmul.f32 %v428, %v454
        %v465 = vmul.f32 %v429, %v454
        %v466 = vmul.f32 %v430, %v454
        %v467 = vmul.f32 %v431, %v454
        %v468 = vmul.f32 %v432, %v454
        %v469 = vmul.f32 %v433, %v454
        %v470 = vmul.f32 %v434, %v454
        %v471 = vmul.f32 %v435, %v454
        %v472 = vmul.f32 %v436, %v454
        %v473 = vmul.f32 %v437, %v454
        %v474 = vmul.f32 %v438, %v454
        %v475 = vmul.f32 %v439, %v454
        %v476 = vmul.f32 %v440, %v454
        %v477 = vmul.f32 %v441, %v454
        %v478 = vmul.f32 %v442, %v454
        %v479 = vmul.f32 %v443, %v454
        %v480 = vmul.f32 %v444, %v454
        %v481 = vmul.f32 %v445, %v454
        %v482 = vmul.f32 %v446, %v454
        %v483 = vmul.f32 %v447, %v454
        %v484 = vmul.f32 %v448, %v454
        %v485 = vmul.f32 %v449, %v454
        %v486 = vmul.f32 %v450, %v454
        %v487 = vadd.f32 %v387, %v455
        %v488 = vadd.f32 %v388, %v456
        %v489 = vadd.f32 %v389, %v457
        %v490 = vadd.f32 %v390, %v458
        %v491 = vadd.f32 %v391, %v459
        %v492 = vadd.f32 %v392, %v460
        %v493 = vadd.f32 %v393, %v461
        %v494 = vadd.f32 %v394, %v462
        %v495 = vadd.f32 %v395, %v463
        %v496 = vadd.f32 %v396, %v464
        %v497 = vadd.f32 %v397, %v465
        %v498 = vadd.f32 %v398, %v466
        %v499 = vadd.f32 %v399, %v467
        %v500 = vadd.f32 %v400, %v468
        %v501 = vadd.f32 %v401, %v469
        %v502 = vadd.f32 %v402, %v470
        %v503 = vadd.f32 %v403, %v471
        %v504 = vadd.f32 %v404, %v472
        %v505 = vadd.f32 %v405, %v473
        %v506 = vadd.f32 %v406, %v474
        %v507 = vadd.f32 %v407, %v475
        %v508 = vadd.f32 %v408, %v476
        %v509 = vadd.f32 %v409, %v477
        %v510 = vadd.f32 %v410, %v478
        %v511 = vadd.f32 %v411, %v479
        %v512 = vadd.f32 %v412, %v480
        %v513 = vadd.f32 %v413, %v481
        %v514 = vadd.f32 %v414, %v482
        %v515 = vadd.f32 %v415, %v483
        %v516 = vadd.f32 %v416, %v484
        %v517 = vadd.f32 %v417, %v485
        %v518 = vadd.f32 %v418, %v486
        %v519 = vld [vmem:[#allocation2 + $0x2] sm:$0xff]
        %v520 = vld [vmem:[#allocation2 + $0xa] sm:$0xff]
        %v521 = vld [vmem:[#allocation2 + $0x1a] sm:$0xff]
        %v522 = vld [vmem:[#allocation2 + $0x22] sm:$0xff]
        %v523 = vld [vmem:[#allocation2 + $0x32] sm:$0xff]
        %v524 = vld [vmem:[#allocation2 + $0x3a] sm:$0xff]
        %v525 = vld [vmem:[#allocation2 + $0x4a] sm:$0xff]
        %v526 = vld [vmem:[#allocation2 + $0x52] sm:$0xff]
        %v527 = vld [vmem:[#allocation2 + $0x62] sm:$0xff]
        %v528 = vld [vmem:[#allocation2 + $0x6a] sm:$0xff]
        %v529 = vld [vmem:[#allocation2 + $0x7a] sm:$0xff]
        %v530 = vld [vmem:[#allocation2 + $0x82] sm:$0xff]
        %v531 = vld [vmem:[#allocation2 + $0x92] sm:$0xff]
        %v532 = vld [vmem:[#allocation2 + $0x9a] sm:$0xff]
        %v533 = vld [vmem:[#allocation2 + $0xaa] sm:$0xff]
        %v534 = vld [vmem:[#allocation2 + $0xb2] sm:$0xff]
        %v535 = vld [vmem:[#allocation2 + $0xc2] sm:$0xff]
        %v536 = vld [vmem:[#allocation2 + $0xca] sm:$0xff]
        %v537 = vld [vmem:[#allocation2 + $0xda] sm:$0xff]
        %v538 = vld [vmem:[#allocation2 + $0xe2] sm:$0xff]
        %v539 = vld [vmem:[#allocation2 + $0xf2] sm:$0xff]
        %v540 = vld [vmem:[#allocation2 + $0xfa] sm:$0xff]
        %v541 = vld [vmem:[#allocation2 + $0x10a] sm:$0xff]
        %v542 = vld [vmem:[#allocation2 + $0x112] sm:$0xff]
        %v543 = vld [vmem:[#allocation2 + $0x122] sm:$0xff]
        %v544 = vld [vmem:[#allocation2 + $0x12a] sm:$0xff]
        %v545 = vld [vmem:[#allocation2 + $0x13a] sm:$0xff]
        %v546 = vld [vmem:[#allocation2 + $0x142] sm:$0xff]
        %v547 = vld [vmem:[#allocation2 + $0x152] sm:$0xff]
        %v548 = vld [vmem:[#allocation2 + $0x15a] sm:$0xff]
        %v549 = vld [vmem:[#allocation2 + $0x16a] sm:$0xff]
        %v550 = vld [vmem:[#allocation2 + $0x172] sm:$0xff]
        %v551 = vlaneseq
        %v552 = vshrl.u32 %v551, 7
        %v553 = vsub.s32 2, %v552
        %v554 = vrot.slane %v348, %v553
        %v555 = vmul.f32 %v519, %v554
        %v556 = vmul.f32 %v520, %v554
        %v557 = vmul.f32 %v521, %v554
        %v558 = vmul.f32 %v522, %v554
        %v559 = vmul.f32 %v523, %v554
        %v560 = vmul.f32 %v524, %v554
        %v561 = vmul.f32 %v525, %v554
        %v562 = vmul.f32 %v526, %v554
        %v563 = vmul.f32 %v527, %v554
        %v564 = vmul.f32 %v528, %v554
        %v565 = vmul.f32 %v529, %v554
        %v566 = vmul.f32 %v530, %v554
        %v567 = vmul.f32 %v531, %v554
        %v568 = vmul.f32 %v532, %v554
        %v569 = vmul.f32 %v533, %v554
        %v570 = vmul.f32 %v534, %v554
        %v571 = vmul.f32 %v535, %v554
        %v572 = vmul.f32 %v536, %v554
        %v573 = vmul.f32 %v537, %v554
        %v574 = vmul.f32 %v538, %v554
        %v575 = vmul.f32 %v539, %v554
        %v576 = vmul.f32 %v540, %v554
        %v577 = vmul.f32 %v541, %v554
        %v578 = vmul.f32 %v542, %v554
        %v579 = vmul.f32 %v543, %v554
        %v580 = vmul.f32 %v544, %v554
        %v581 = vmul.f32 %v545, %v554
        %v582 = vmul.f32 %v546, %v554
        %v583 = vmul.f32 %v547, %v554
        %v584 = vmul.f32 %v548, %v554
        %v585 = vmul.f32 %v549, %v554
        %v586 = vmul.f32 %v550, %v554
        %v587 = vadd.f32 %v487, %v555
        %v588 = vadd.f32 %v488, %v556
        %v589 = vadd.f32 %v489, %v557
        %v590 = vadd.f32 %v490, %v558
        %v591 = vadd.f32 %v491, %v559
        %v592 = vadd.f32 %v492, %v560
        %v593 = vadd.f32 %v493, %v561
        %v594 = vadd.f32 %v494, %v562
        %v595 = vadd.f32 %v495, %v563
        %v596 = vadd.f32 %v496, %v564
        %v597 = vadd.f32 %v497, %v565
        %v598 = vadd.f32 %v498, %v566
        %v599 = vadd.f32 %v499, %v567
        %v600 = vadd.f32 %v500, %v568
        %v601 = vadd.f32 %v501, %v569
        %v602 = vadd.f32 %v502, %v570
        %v603 = vadd.f32 %v503, %v571
        %v604 = vadd.f32 %v504, %v572
        %v605 = vadd.f32 %v505, %v573
        %v606 = vadd.f32 %v506, %v574
        %v607 = vadd.f32 %v507, %v575
        %v608 = vadd.f32 %v508, %v576
        %v609 = vadd.f32 %v509, %v577
        %v610 = vadd.f32 %v510, %v578
        %v611 = vadd.f32 %v511, %v579
        %v612 = vadd.f32 %v512, %v580
        %v613 = vadd.f32 %v513, %v581
        %v614 = vadd.f32 %v514, %v582
        %v615 = vadd.f32 %v515, %v583
        %v616 = vadd.f32 %v516, %v584
        %v617 = vadd.f32 %v517, %v585
        %v618 = vadd.f32 %v518, %v586
        %v619 = vld [vmem:[%s282] sm:$0xff]
        %v620 = vld [vmem:[%s282 + $0x8] sm:$0xff]
        %v621 = vld [vmem:[%s282 + $0x18] sm:$0xff]
        %v622 = vld [vmem:[%s282 + $0x20] sm:$0xff]
        %v623 = vld [vmem:[%s282 + $0x30] sm:$0xff]
        %v624 = vld [vmem:[%s282 + $0x38] sm:$0xff]
        %v625 = vld [vmem:[%s282 + $0x48] sm:$0xff]
        %v626 = vld [vmem:[%s282 + $0x50] sm:$0xff]
        %v627 = vld [vmem:[%s282 + $0x60] sm:$0xff]
        %v628 = vld [vmem:[%s282 + $0x68] sm:$0xff]
        %v629 = vld [vmem:[%s282 + $0x78] sm:$0xff]
        %v630 = vld [vmem:[%s282 + $0x80] sm:$0xff]
        %v631 = vld [vmem:[%s282 + $0x90] sm:$0xff]
        %v632 = vld [vmem:[%s282 + $0x98] sm:$0xff]
        %v633 = vld [vmem:[%s282 + $0xa8] sm:$0xff]
        %v634 = vld [vmem:[%s282 + $0xb0] sm:$0xff]
        %v635 = vld [vmem:[%s282 + $0xc0] sm:$0xff]
        %v636 = vld [vmem:[%s282 + $0xc8] sm:$0xff]
        %v637 = vld [vmem:[%s282 + $0xd8] sm:$0xff]
        %v638 = vld [vmem:[%s282 + $0xe0] sm:$0xff]
        %v639 = vld [vmem:[%s282 + $0xf0] sm:$0xff]
        %v640 = vld [vmem:[%s282 + $0xf8] sm:$0xff]
        %v641 = vld [vmem:[%s282 + $0x108] sm:$0xff]
        %v642 = vld [vmem:[%s282 + $0x110] sm:$0xff]
        %v643 = vld [vmem:[%s282 + $0x120] sm:$0xff]
        %v644 = vld [vmem:[%s282 + $0x128] sm:$0xff]
        %v645 = vld [vmem:[%s282 + $0x138] sm:$0xff]
        %v646 = vld [vmem:[%s282 + $0x140] sm:$0xff]
        %v647 = vld [vmem:[%s282 + $0x150] sm:$0xff]
        %v648 = vld [vmem:[%s282 + $0x158] sm:$0xff]
        %v649 = vld [vmem:[%s282 + $0x168] sm:$0xff]
        %v650 = vld [vmem:[%s282 + $0x170] sm:$0xff]
        %v651 = vlaneseq
        %v652 = vshrl.u32 %v651, 7
        %v653 = vsub.s32 0, %v652
        %v654 = vrot.slane %v349, %v653
        %v655 = vmul.f32 %v619, %v654
        %v656 = vmul.f32 %v620, %v654
        %v657 = vmul.f32 %v621, %v654
        %v658 = vmul.f32 %v622, %v654
        %v659 = vmul.f32 %v623, %v654
        %v660 = vmul.f32 %v624, %v654
        %v661 = vmul.f32 %v625, %v654
        %v662 = vmul.f32 %v626, %v654
        %v663 = vmul.f32 %v627, %v654
        %v664 = vmul.f32 %v628, %v654
        %v665 = vmul.f32 %v629, %v654
        %v666 = vmul.f32 %v630, %v654
        %v667 = vmul.f32 %v631, %v654
        %v668 = vmul.f32 %v632, %v654
        %v669 = vmul.f32 %v633, %v654
        %v670 = vmul.f32 %v634, %v654
        %v671 = vmul.f32 %v635, %v654
        %v672 = vmul.f32 %v636, %v654
        %v673 = vmul.f32 %v637, %v654
        %v674 = vmul.f32 %v638, %v654
        %v675 = vmul.f32 %v639, %v654
        %v676 = vmul.f32 %v640, %v654
        %v677 = vmul.f32 %v641, %v654
        %v678 = vmul.f32 %v642, %v654
        %v679 = vmul.f32 %v643, %v654
        %v680 = vmul.f32 %v644, %v654
        %v681 = vmul.f32 %v645, %v654
        %v682 = vmul.f32 %v646, %v654
        %v683 = vmul.f32 %v647, %v654
        %v684 = vmul.f32 %v648, %v654
        %v685 = vmul.f32 %v649, %v654
        %v686 = vmul.f32 %v650, %v654
        %v687 = vadd.f32 %v587, %v655
        %v688 = vadd.f32 %v588, %v656
        %v689 = vadd.f32 %v589, %v657
        %v690 = vadd.f32 %v590, %v658
        %v691 = vadd.f32 %v591, %v659
        %v692 = vadd.f32 %v592, %v660
        %v693 = vadd.f32 %v593, %v661
        %v694 = vadd.f32 %v594, %v662
        %v695 = vadd.f32 %v595, %v663
        %v696 = vadd.f32 %v596, %v664
        %v697 = vadd.f32 %v597, %v665
        %v698 = vadd.f32 %v598, %v666
        %v699 = vadd.f32 %v599, %v667
        %v700 = vadd.f32 %v600, %v668
        %v701 = vadd.f32 %v601, %v669
        %v702 = vadd.f32 %v602, %v670
        %v703 = vadd.f32 %v603, %v671
        %v704 = vadd.f32 %v604, %v672
        %v705 = vadd.f32 %v605, %v673
        %v706 = vadd.f32 %v606, %v674
        %v707 = vadd.f32 %v607, %v675
        %v708 = vadd.f32 %v608, %v676
        %v709 = vadd.f32 %v609, %v677
        %v710 = vadd.f32 %v610, %v678
        %v711 = vadd.f32 %v611, %v679
        %v712 = vadd.f32 %v612, %v680
        %v713 = vadd.f32 %v613, %v681
        %v714 = vadd.f32 %v614, %v682
        %v715 = vadd.f32 %v615, %v683
        %v716 = vadd.f32 %v616, %v684
        %v717 = vadd.f32 %v617, %v685
        %v718 = vadd.f32 %v618, %v686
        %v719 = vld [vmem:[%s282 + $0x1] sm:$0xff]
        %v720 = vld [vmem:[%s282 + $0x9] sm:$0xff]
        %v721 = vld [vmem:[%s282 + $0x19] sm:$0xff]
        %v722 = vld [vmem:[%s282 + $0x21] sm:$0xff]
        %v723 = vld [vmem:[%s282 + $0x31] sm:$0xff]
        %v724 = vld [vmem:[%s282 + $0x39] sm:$0xff]
        %v725 = vld [vmem:[%s282 + $0x49] sm:$0xff]
        %v726 = vld [vmem:[%s282 + $0x51] sm:$0xff]
        %v727 = vld [vmem:[%s282 + $0x61] sm:$0xff]
        %v728 = vld [vmem:[%s282 + $0x69] sm:$0xff]
        %v729 = vld [vmem:[%s282 + $0x79] sm:$0xff]
        %v730 = vld [vmem:[%s282 + $0x81] sm:$0xff]
        %v731 = vld [vmem:[%s282 + $0x91] sm:$0xff]
        %v732 = vld [vmem:[%s282 + $0x99] sm:$0xff]
        %v733 = vld [vmem:[%s282 + $0xa9] sm:$0xff]
        %v734 = vld [vmem:[%s282 + $0xb1] sm:$0xff]
        %v735 = vld [vmem:[%s282 + $0xc1] sm:$0xff]
        %v736 = vld [vmem:[%s282 + $0xc9] sm:$0xff]
        %v737 = vld [vmem:[%s282 + $0xd9] sm:$0xff]
        %v738 = vld [vmem:[%s282 + $0xe1] sm:$0xff]
        %v739 = vld [vmem:[%s282 + $0xf1] sm:$0xff]
        %v740 = vld [vmem:[%s282 + $0xf9] sm:$0xff]
        %v741 = vld [vmem:[%s282 + $0x109] sm:$0xff]
        %v742 = vld [vmem:[%s282 + $0x111] sm:$0xff]
        %v743 = vld [vmem:[%s282 + $0x121] sm:$0xff]
        %v744 = vld [vmem:[%s282 + $0x129] sm:$0xff]
        %v745 = vld [vmem:[%s282 + $0x139] sm:$0xff]
        %v746 = vld [vmem:[%s282 + $0x141] sm:$0xff]
        %v747 = vld [vmem:[%s282 + $0x151] sm:$0xff]
        %v748 = vld [vmem:[%s282 + $0x159] sm:$0xff]
        %v749 = vld [vmem:[%s282 + $0x169] sm:$0xff]
        %v750 = vld [vmem:[%s282 + $0x171] sm:$0xff]
        %v751 = vlaneseq
        %v752 = vshrl.u32 %v751, 7
        %v753 = vsub.s32 1, %v752
        %v754 = vrot.slane %v349, %v753
        %v755 = vmul.f32 %v719, %v754
        %v756 = vmul.f32 %v720, %v754
        %v757 = vmul.f32 %v721, %v754
        %v758 = vmul.f32 %v722, %v754
        %v759 = vmul.f32 %v723, %v754
        %v760 = vmul.f32 %v724, %v754
        %v761 = vmul.f32 %v725, %v754
        %v762 = vmul.f32 %v726, %v754
        %v763 = vmul.f32 %v727, %v754
        %v764 = vmul.f32 %v728, %v754
        %v765 = vmul.f32 %v729, %v754
        %v766 = vmul.f32 %v730, %v754
        %v767 = vmul.f32 %v731, %v754
        %v768 = vmul.f32 %v732, %v754
        %v769 = vmul.f32 %v733, %v754
        %v770 = vmul.f32 %v734, %v754
        %v771 = vmul.f32 %v735, %v754
        %v772 = vmul.f32 %v736, %v754
        %v773 = vmul.f32 %v737, %v754
        %v774 = vmul.f32 %v738, %v754
        %v775 = vmul.f32 %v739, %v754
        %v776 = vmul.f32 %v740, %v754
        %v777 = vmul.f32 %v741, %v754
        %v778 = vmul.f32 %v742, %v754
        %v779 = vmul.f32 %v743, %v754
        %v780 = vmul.f32 %v744, %v754
        %v781 = vmul.f32 %v745, %v754
        %v782 = vmul.f32 %v746, %v754
        %v783 = vmul.f32 %v747, %v754
        %v784 = vmul.f32 %v748, %v754
        %v785 = vmul.f32 %v749, %v754
        %v786 = vmul.f32 %v750, %v754
        %v787 = vadd.f32 %v687, %v755
        %v788 = vadd.f32 %v688, %v756
        %v789 = vadd.f32 %v689, %v757
        %v790 = vadd.f32 %v690, %v758
        %v791 = vadd.f32 %v691, %v759
        %v792 = vadd.f32 %v692, %v760
        %v793 = vadd.f32 %v693, %v761
        %v794 = vadd.f32 %v694, %v762
        %v795 = vadd.f32 %v695, %v763
        %v796 = vadd.f32 %v696, %v764
        %v797 = vadd.f32 %v697, %v765
        %v798 = vadd.f32 %v698, %v766
        %v799 = vadd.f32 %v699, %v767
        %v800 = vadd.f32 %v700, %v768
        %v801 = vadd.f32 %v701, %v769
        %v802 = vadd.f32 %v702, %v770
        %v803 = vadd.f32 %v703, %v771
        %v804 = vadd.f32 %v704, %v772
        %v805 = vadd.f32 %v705, %v773
        %v806 = vadd.f32 %v706, %v774
        %v807 = vadd.f32 %v707, %v775
        %v808 = vadd.f32 %v708, %v776
        %v809 = vadd.f32 %v709, %v777
        %v810 = vadd.f32 %v710, %v778
        %v811 = vadd.f32 %v711, %v779
        %v812 = vadd.f32 %v712, %v780
        %v813 = vadd.f32 %v713, %v781
        %v814 = vadd.f32 %v714, %v782
        %v815 = vadd.f32 %v715, %v783
        %v816 = vadd.f32 %v716, %v784
        %v817 = vadd.f32 %v717, %v785
        %v818 = vadd.f32 %v718, %v786
        %v819 = vld [vmem:[%s282 + $0x2] sm:$0xff]
        %v820 = vld [vmem:[%s282 + $0xa] sm:$0xff]
        %v821 = vld [vmem:[%s282 + $0x1a] sm:$0xff]
        %v822 = vld [vmem:[%s282 + $0x22] sm:$0xff]
        %v823 = vld [vmem:[%s282 + $0x32] sm:$0xff]
        %v824 = vld [vmem:[%s282 + $0x3a] sm:$0xff]
        %v825 = vld [vmem:[%s282 + $0x4a] sm:$0xff]
        %v826 = vld [vmem:[%s282 + $0x52] sm:$0xff]
        %v827 = vld [vmem:[%s282 + $0x62] sm:$0xff]
        %v828 = vld [vmem:[%s282 + $0x6a] sm:$0xff]
        %v829 = vld [vmem:[%s282 + $0x7a] sm:$0xff]
        %v830 = vld [vmem:[%s282 + $0x82] sm:$0xff]
        %v831 = vld [vmem:[%s282 + $0x92] sm:$0xff]
        %v832 = vld [vmem:[%s282 + $0x9a] sm:$0xff]
        %v833 = vld [vmem:[%s282 + $0xaa] sm:$0xff]
        %v834 = vld [vmem:[%s282 + $0xb2] sm:$0xff]
        %v835 = vld [vmem:[%s282 + $0xc2] sm:$0xff]
        %v836 = vld [vmem:[%s282 + $0xca] sm:$0xff]
        %v837 = vld [vmem:[%s282 + $0xda] sm:$0xff]
        %v838 = vld [vmem:[%s282 + $0xe2] sm:$0xff]
        %v839 = vld [vmem:[%s282 + $0xf2] sm:$0xff]
        %v840 = vld [vmem:[%s282 + $0xfa] sm:$0xff]
        %v841 = vld [vmem:[%s282 + $0x10a] sm:$0xff]
        %v842 = vld [vmem:[%s282 + $0x112] sm:$0xff]
        %v843 = vld [vmem:[%s282 + $0x122] sm:$0xff]
        %v844 = vld [vmem:[%s282 + $0x12a] sm:$0xff]
        %v845 = vld [vmem:[%s282 + $0x13a] sm:$0xff]
        %v846 = vld [vmem:[%s282 + $0x142] sm:$0xff]
        %v847 = vld [vmem:[%s282 + $0x152] sm:$0xff]
        %v848 = vld [vmem:[%s282 + $0x15a] sm:$0xff]
        %v849 = vld [vmem:[%s282 + $0x16a] sm:$0xff]
        %v850 = vld [vmem:[%s282 + $0x172] sm:$0xff]
        %v851 = vlaneseq
        %v852 = vshrl.u32 %v851, 7
        %v853 = vsub.s32 2, %v852
        %v854 = vrot.slane %v349, %v853
        %v855 = vmul.f32 %v819, %v854
        %v856 = vmul.f32 %v820, %v854
        %v857 = vmul.f32 %v821, %v854
        %v858 = vmul.f32 %v822, %v854
        %v859 = vmul.f32 %v823, %v854
        %v860 = vmul.f32 %v824, %v854
        %v861 = vmul.f32 %v825, %v854
        %v862 = vmul.f32 %v826, %v854
        %v863 = vmul.f32 %v827, %v854
        %v864 = vmul.f32 %v828, %v854
        %v865 = vmul.f32 %v829, %v854
        %v866 = vmul.f32 %v830, %v854
        %v867 = vmul.f32 %v831, %v854
        %v868 = vmul.f32 %v832, %v854
        %v869 = vmul.f32 %v833, %v854
        %v870 = vmul.f32 %v834, %v854
        %v871 = vmul.f32 %v835, %v854
        %v872 = vmul.f32 %v836, %v854
        %v873 = vmul.f32 %v837, %v854
        %v874 = vmul.f32 %v838, %v854
        %v875 = vmul.f32 %v839, %v854
        %v876 = vmul.f32 %v840, %v854
        %v877 = vmul.f32 %v841, %v854
        %v878 = vmul.f32 %v842, %v854
        %v879 = vmul.f32 %v843, %v854
        %v880 = vmul.f32 %v844, %v854
        %v881 = vmul.f32 %v845, %v854
        %v882 = vmul.f32 %v846, %v854
        %v883 = vmul.f32 %v847, %v854
        %v884 = vmul.f32 %v848, %v854
        %v885 = vmul.f32 %v849, %v854
        %v886 = vmul.f32 %v850, %v854
        %v887 = vadd.f32 %v787, %v855
        %v888 = vadd.f32 %v788, %v856
        %v889 = vadd.f32 %v789, %v857
        %v890 = vadd.f32 %v790, %v858
        %v891 = vadd.f32 %v791, %v859
        %v892 = vadd.f32 %v792, %v860
        %v893 = vadd.f32 %v793, %v861
        %v894 = vadd.f32 %v794, %v862
        %v895 = vadd.f32 %v795, %v863
        %v896 = vadd.f32 %v796, %v864
        %v897 = vadd.f32 %v797, %v865
        %v898 = vadd.f32 %v798, %v866
        %v899 = vadd.f32 %v799, %v867
        %v900 = vadd.f32 %v800, %v868
        %v901 = vadd.f32 %v801, %v869
        %v902 = vadd.f32 %v802, %v870
        %v903 = vadd.f32 %v803, %v871
        %v904 = vadd.f32 %v804, %v872
        %v905 = vadd.f32 %v805, %v873
        %v906 = vadd.f32 %v806, %v874
        %v907 = vadd.f32 %v807, %v875
        %v908 = vadd.f32 %v808, %v876
        %v909 = vadd.f32 %v809, %v877
        %v910 = vadd.f32 %v810, %v878
        %v911 = vadd.f32 %v811, %v879
        %v912 = vadd.f32 %v812, %v880
        %v913 = vadd.f32 %v813, %v881
        %v914 = vadd.f32 %v814, %v882
        %v915 = vadd.f32 %v815, %v883
        %v916 = vadd.f32 %v816, %v884
        %v917 = vadd.f32 %v817, %v885
        %v918 = vadd.f32 %v818, %v886
        %s919 = scalar_lea.vmem [#allocation2], 48
        %v920 = vld [vmem:[%s919] sm:$0xff]
        %v921 = vld [vmem:[%s919 + $0x8] sm:$0xff]
        %v922 = vld [vmem:[%s919 + $0x18] sm:$0xff]
        %v923 = vld [vmem:[%s919 + $0x20] sm:$0xff]
        %v924 = vld [vmem:[%s919 + $0x30] sm:$0xff]
        %v925 = vld [vmem:[%s919 + $0x38] sm:$0xff]
        %v926 = vld [vmem:[%s919 + $0x48] sm:$0xff]
        %v927 = vld [vmem:[%s919 + $0x50] sm:$0xff]
        %v928 = vld [vmem:[%s919 + $0x60] sm:$0xff]
        %v929 = vld [vmem:[%s919 + $0x68] sm:$0xff]
        %v930 = vld [vmem:[%s919 + $0x78] sm:$0xff]
        %v931 = vld [vmem:[%s919 + $0x80] sm:$0xff]
        %v932 = vld [vmem:[%s919 + $0x90] sm:$0xff]
        %v933 = vld [vmem:[%s919 + $0x98] sm:$0xff]
        %v934 = vld [vmem:[%s919 + $0xa8] sm:$0xff]
        %v935 = vld [vmem:[%s919 + $0xb0] sm:$0xff]
        %v936 = vld [vmem:[%s919 + $0xc0] sm:$0xff]
        %v937 = vld [vmem:[%s919 + $0xc8] sm:$0xff]
        %v938 = vld [vmem:[%s919 + $0xd8] sm:$0xff]
        %v939 = vld [vmem:[%s919 + $0xe0] sm:$0xff]
        %v940 = vld [vmem:[%s919 + $0xf0] sm:$0xff]
        %v941 = vld [vmem:[%s919 + $0xf8] sm:$0xff]
        %v942 = vld [vmem:[%s919 + $0x108] sm:$0xff]
        %v943 = vld [vmem:[%s919 + $0x110] sm:$0xff]
        %v944 = vld [vmem:[%s919 + $0x120] sm:$0xff]
        %v945 = vld [vmem:[%s919 + $0x128] sm:$0xff]
        %v946 = vld [vmem:[%s919 + $0x138] sm:$0xff]
        %v947 = vld [vmem:[%s919 + $0x140] sm:$0xff]
        %v948 = vld [vmem:[%s919 + $0x150] sm:$0xff]
        %v949 = vld [vmem:[%s919 + $0x158] sm:$0xff]
        %v950 = vld [vmem:[%s919 + $0x168] sm:$0xff]
        %v951 = vld [vmem:[%s919 + $0x170] sm:$0xff]
        %v952 = vlaneseq
        %v953 = vshrl.u32 %v952, 7
        %v954 = vsub.s32 0, %v953
        %v955 = vrot.slane %v350, %v954
        %v956 = vmul.f32 %v920, %v955
        %v957 = vmul.f32 %v921, %v955
        %v958 = vmul.f32 %v922, %v955
        %v959 = vmul.f32 %v923, %v955
        %v960 = vmul.f32 %v924, %v955
        %v961 = vmul.f32 %v925, %v955
        %v962 = vmul.f32 %v926, %v955
        %v963 = vmul.f32 %v927, %v955
        %v964 = vmul.f32 %v928, %v955
        %v965 = vmul.f32 %v929, %v955
        %v966 = vmul.f32 %v930, %v955
        %v967 = vmul.f32 %v931, %v955
        %v968 = vmul.f32 %v932, %v955
        %v969 = vmul.f32 %v933, %v955
        %v970 = vmul.f32 %v934, %v955
        %v971 = vmul.f32 %v935, %v955
        %v972 = vmul.f32 %v936, %v955
        %v973 = vmul.f32 %v937, %v955
        %v974 = vmul.f32 %v938, %v955
        %v975 = vmul.f32 %v939, %v955
        %v976 = vmul.f32 %v940, %v955
        %v977 = vmul.f32 %v941, %v955
        %v978 = vmul.f32 %v942, %v955
        %v979 = vmul.f32 %v943, %v955
        %v980 = vmul.f32 %v944, %v955
        %v981 = vmul.f32 %v945, %v955
        %v982 = vmul.f32 %v946, %v955
        %v983 = vmul.f32 %v947, %v955
        %v984 = vmul.f32 %v948, %v955
        %v985 = vmul.f32 %v949, %v955
        %v986 = vmul.f32 %v950, %v955
        %v987 = vmul.f32 %v951, %v955
        %v988 = vadd.f32 %v887, %v956
        %v989 = vadd.f32 %v888, %v957
        %v990 = vadd.f32 %v889, %v958
        %v991 = vadd.f32 %v890, %v959
        %v992 = vadd.f32 %v891, %v960
        %v993 = vadd.f32 %v892, %v961
        %v994 = vadd.f32 %v893, %v962
        %v995 = vadd.f32 %v894, %v963
        %v996 = vadd.f32 %v895, %v964
        %v997 = vadd.f32 %v896, %v965
        %v998 = vadd.f32 %v897, %v966
        %v999 = vadd.f32 %v898, %v967
        %v1000 = vadd.f32 %v899, %v968
        %v1001 = vadd.f32 %v900, %v969
        %v1002 = vadd.f32 %v901, %v970
        %v1003 = vadd.f32 %v902, %v971
        %v1004 = vadd.f32 %v903, %v972
        %v1005 = vadd.f32 %v904, %v973
        %v1006 = vadd.f32 %v905, %v974
        %v1007 = vadd.f32 %v906, %v975
        %v1008 = vadd.f32 %v907, %v976
        %v1009 = vadd.f32 %v908, %v977
        %v1010 = vadd.f32 %v909, %v978
        %v1011 = vadd.f32 %v910, %v979
        %v1012 = vadd.f32 %v911, %v980
        %v1013 = vadd.f32 %v912, %v981
        %v1014 = vadd.f32 %v913, %v982
        %v1015 = vadd.f32 %v914, %v983
        %v1016 = vadd.f32 %v915, %v984
        %v1017 = vadd.f32 %v916, %v985
        %v1018 = vadd.f32 %v917, %v986
        %v1019 = vadd.f32 %v918, %v987
        %v1020 = vld [vmem:[%s919 + $0x1] sm:$0xff]
        %v1021 = vld [vmem:[%s919 + $0x9] sm:$0xff]
        %v1022 = vld [vmem:[%s919 + $0x19] sm:$0xff]
        %v1023 = vld [vmem:[%s919 + $0x21] sm:$0xff]
        %v1024 = vld [vmem:[%s919 + $0x31] sm:$0xff]
        %v1025 = vld [vmem:[%s919 + $0x39] sm:$0xff]
        %v1026 = vld [vmem:[%s919 + $0x49] sm:$0xff]
        %v1027 = vld [vmem:[%s919 + $0x51] sm:$0xff]
        %v1028 = vld [vmem:[%s919 + $0x61] sm:$0xff]
        %v1029 = vld [vmem:[%s919 + $0x69] sm:$0xff]
        %v1030 = vld [vmem:[%s919 + $0x79] sm:$0xff]
        %v1031 = vld [vmem:[%s919 + $0x81] sm:$0xff]
        %v1032 = vld [vmem:[%s919 + $0x91] sm:$0xff]
        %v1033 = vld [vmem:[%s919 + $0x99] sm:$0xff]
        %v1034 = vld [vmem:[%s919 + $0xa9] sm:$0xff]
        %v1035 = vld [vmem:[%s919 + $0xb1] sm:$0xff]
        %v1036 = vld [vmem:[%s919 + $0xc1] sm:$0xff]
        %v1037 = vld [vmem:[%s919 + $0xc9] sm:$0xff]
        %v1038 = vld [vmem:[%s919 + $0xd9] sm:$0xff]
        %v1039 = vld [vmem:[%s919 + $0xe1] sm:$0xff]
        %v1040 = vld [vmem:[%s919 + $0xf1] sm:$0xff]
        %v1041 = vld [vmem:[%s919 + $0xf9] sm:$0xff]
        %v1042 = vld [vmem:[%s919 + $0x109] sm:$0xff]
        %v1043 = vld [vmem:[%s919 + $0x111] sm:$0xff]
        %v1044 = vld [vmem:[%s919 + $0x121] sm:$0xff]
        %v1045 = vld [vmem:[%s919 + $0x129] sm:$0xff]
        %v1046 = vld [vmem:[%s919 + $0x139] sm:$0xff]
        %v1047 = vld [vmem:[%s919 + $0x141] sm:$0xff]
        %v1048 = vld [vmem:[%s919 + $0x151] sm:$0xff]
        %v1049 = vld [vmem:[%s919 + $0x159] sm:$0xff]
        %v1050 = vld [vmem:[%s919 + $0x169] sm:$0xff]
        %v1051 = vld [vmem:[%s919 + $0x171] sm:$0xff]
        %v1052 = vlaneseq
        %v1053 = vshrl.u32 %v1052, 7
        %v1054 = vsub.s32 1, %v1053
        %v1055 = vrot.slane %v350, %v1054
        %v1056 = vmul.f32 %v1020, %v1055
        %v1057 = vmul.f32 %v1021, %v1055
        %v1058 = vmul.f32 %v1022, %v1055
        %v1059 = vmul.f32 %v1023, %v1055
        %v1060 = vmul.f32 %v1024, %v1055
        %v1061 = vmul.f32 %v1025, %v1055
        %v1062 = vmul.f32 %v1026, %v1055
        %v1063 = vmul.f32 %v1027, %v1055
        %v1064 = vmul.f32 %v1028, %v1055
        %v1065 = vmul.f32 %v1029, %v1055
        %v1066 = vmul.f32 %v1030, %v1055
        %v1067 = vmul.f32 %v1031, %v1055
        %v1068 = vmul.f32 %v1032, %v1055
        %v1069 = vmul.f32 %v1033, %v1055
        %v1070 = vmul.f32 %v1034, %v1055
        %v1071 = vmul.f32 %v1035, %v1055
        %v1072 = vmul.f32 %v1036, %v1055
        %v1073 = vmul.f32 %v1037, %v1055
        %v1074 = vmul.f32 %v1038, %v1055
        %v1075 = vmul.f32 %v1039, %v1055
        %v1076 = vmul.f32 %v1040, %v1055
        %v1077 = vmul.f32 %v1041, %v1055
        %v1078 = vmul.f32 %v1042, %v1055
        %v1079 = vmul.f32 %v1043, %v1055
        %v1080 = vmul.f32 %v1044, %v1055
        %v1081 = vmul.f32 %v1045, %v1055
        %v1082 = vmul.f32 %v1046, %v1055
        %v1083 = vmul.f32 %v1047, %v1055
        %v1084 = vmul.f32 %v1048, %v1055
        %v1085 = vmul.f32 %v1049, %v1055
        %v1086 = vmul.f32 %v1050, %v1055
        %v1087 = vmul.f32 %v1051, %v1055
        %v1088 = vadd.f32 %v988, %v1056
        %v1089 = vadd.f32 %v989, %v1057
        %v1090 = vadd.f32 %v990, %v1058
        %v1091 = vadd.f32 %v991, %v1059
        %v1092 = vadd.f32 %v992, %v1060
        %v1093 = vadd.f32 %v993, %v1061
        %v1094 = vadd.f32 %v994, %v1062
        %v1095 = vadd.f32 %v995, %v1063
        %v1096 = vadd.f32 %v996, %v1064
        %v1097 = vadd.f32 %v997, %v1065
        %v1098 = vadd.f32 %v998, %v1066
        %v1099 = vadd.f32 %v999, %v1067
        %v1100 = vadd.f32 %v1000, %v1068
        %v1101 = vadd.f32 %v1001, %v1069
        %v1102 = vadd.f32 %v1002, %v1070
        %v1103 = vadd.f32 %v1003, %v1071
        %v1104 = vadd.f32 %v1004, %v1072
        %v1105 = vadd.f32 %v1005, %v1073
        %v1106 = vadd.f32 %v1006, %v1074
        %v1107 = vadd.f32 %v1007, %v1075
        %v1108 = vadd.f32 %v1008, %v1076
        %v1109 = vadd.f32 %v1009, %v1077
        %v1110 = vadd.f32 %v1010, %v1078
        %v1111 = vadd.f32 %v1011, %v1079
        %v1112 = vadd.f32 %v1012, %v1080
        %v1113 = vadd.f32 %v1013, %v1081
        %v1114 = vadd.f32 %v1014, %v1082
        %v1115 = vadd.f32 %v1015, %v1083
        %v1116 = vadd.f32 %v1016, %v1084
        %v1117 = vadd.f32 %v1017, %v1085
        %v1118 = vadd.f32 %v1018, %v1086
        %v1119 = vadd.f32 %v1019, %v1087
        %v1120 = vld [vmem:[%s919 + $0x2] sm:$0xff]
        %v1121 = vld [vmem:[%s919 + $0xa] sm:$0xff]
        %v1122 = vld [vmem:[%s919 + $0x1a] sm:$0xff]
        %v1123 = vld [vmem:[%s919 + $0x22] sm:$0xff]
        %v1124 = vld [vmem:[%s919 + $0x32] sm:$0xff]
        %v1125 = vld [vmem:[%s919 + $0x3a] sm:$0xff]
        %v1126 = vld [vmem:[%s919 + $0x4a] sm:$0xff]
        %v1127 = vld [vmem:[%s919 + $0x52] sm:$0xff]
        %v1128 = vld [vmem:[%s919 + $0x62] sm:$0xff]
        %v1129 = vld [vmem:[%s919 + $0x6a] sm:$0xff]
        %v1130 = vld [vmem:[%s919 + $0x7a] sm:$0xff]
        %v1131 = vld [vmem:[%s919 + $0x82] sm:$0xff]
        %v1132 = vld [vmem:[%s919 + $0x92] sm:$0xff]
        %v1133 = vld [vmem:[%s919 + $0x9a] sm:$0xff]
        %v1134 = vld [vmem:[%s919 + $0xaa] sm:$0xff]
        %v1135 = vld [vmem:[%s919 + $0xb2] sm:$0xff]
        %v1136 = vld [vmem:[%s919 + $0xc2] sm:$0xff]
        %v1137 = vld [vmem:[%s919 + $0xca] sm:$0xff]
        %v1138 = vld [vmem:[%s919 + $0xda] sm:$0xff]
        %v1139 = vld [vmem:[%s919 + $0xe2] sm:$0xff]
        %v1140 = vld [vmem:[%s919 + $0xf2] sm:$0xff]
        %v1141 = vld [vmem:[%s919 + $0xfa] sm:$0xff]
        %v1142 = vld [vmem:[%s919 + $0x10a] sm:$0xff]
        %v1143 = vld [vmem:[%s919 + $0x112] sm:$0xff]
        %v1144 = vld [vmem:[%s919 + $0x122] sm:$0xff]
        %v1145 = vld [vmem:[%s919 + $0x12a] sm:$0xff]
        %v1146 = vld [vmem:[%s919 + $0x13a] sm:$0xff]
        %v1147 = vld [vmem:[%s919 + $0x142] sm:$0xff]
        %v1148 = vld [vmem:[%s919 + $0x152] sm:$0xff]
        %v1149 = vld [vmem:[%s919 + $0x15a] sm:$0xff]
        %v1150 = vld [vmem:[%s919 + $0x16a] sm:$0xff]
        %v1151 = vld [vmem:[%s919 + $0x172] sm:$0xff]
        %v1152 = vlaneseq
        %v1153 = vshrl.u32 %v1152, 7
        %v1154 = vsub.s32 2, %v1153
        %v1155 = vrot.slane %v350, %v1154
        %v1156 = vmul.f32 %v1120, %v1155
        %v1157 = vmul.f32 %v1121, %v1155
        %v1158 = vmul.f32 %v1122, %v1155
        %v1159 = vmul.f32 %v1123, %v1155
        %v1160 = vmul.f32 %v1124, %v1155
        %v1161 = vmul.f32 %v1125, %v1155
        %v1162 = vmul.f32 %v1126, %v1155
        %v1163 = vmul.f32 %v1127, %v1155
        %v1164 = vmul.f32 %v1128, %v1155
        %v1165 = vmul.f32 %v1129, %v1155
        %v1166 = vmul.f32 %v1130, %v1155
        %v1167 = vmul.f32 %v1131, %v1155
        %v1168 = vmul.f32 %v1132, %v1155
        %v1169 = vmul.f32 %v1133, %v1155
        %v1170 = vmul.f32 %v1134, %v1155
        %v1171 = vmul.f32 %v1135, %v1155
        %v1172 = vmul.f32 %v1136, %v1155
        %v1173 = vmul.f32 %v1137, %v1155
        %v1174 = vmul.f32 %v1138, %v1155
        %v1175 = vmul.f32 %v1139, %v1155
        %v1176 = vmul.f32 %v1140, %v1155
        %v1177 = vmul.f32 %v1141, %v1155
        %v1178 = vmul.f32 %v1142, %v1155
        %v1179 = vmul.f32 %v1143, %v1155
        %v1180 = vmul.f32 %v1144, %v1155
        %v1181 = vmul.f32 %v1145, %v1155
        %v1182 = vmul.f32 %v1146, %v1155
        %v1183 = vmul.f32 %v1147, %v1155
        %v1184 = vmul.f32 %v1148, %v1155
        %v1185 = vmul.f32 %v1149, %v1155
        %v1186 = vmul.f32 %v1150, %v1155
        %v1187 = vmul.f32 %v1151, %v1155
        %v1188 = vadd.f32 %v1088, %v1156
        %v1189 = vadd.f32 %v1089, %v1157
        %v1190 = vadd.f32 %v1090, %v1158
        %v1191 = vadd.f32 %v1091, %v1159
        %v1192 = vadd.f32 %v1092, %v1160
        %v1193 = vadd.f32 %v1093, %v1161
        %v1194 = vadd.f32 %v1094, %v1162
        %v1195 = vadd.f32 %v1095, %v1163
        %v1196 = vadd.f32 %v1096, %v1164
        %v1197 = vadd.f32 %v1097, %v1165
        %v1198 = vadd.f32 %v1098, %v1166
        %v1199 = vadd.f32 %v1099, %v1167
        %v1200 = vadd.f32 %v1100, %v1168
        %v1201 = vadd.f32 %v1101, %v1169
        %v1202 = vadd.f32 %v1102, %v1170
        %v1203 = vadd.f32 %v1103, %v1171
        %v1204 = vadd.f32 %v1104, %v1172
        %v1205 = vadd.f32 %v1105, %v1173
        %v1206 = vadd.f32 %v1106, %v1174
        %v1207 = vadd.f32 %v1107, %v1175
        %v1208 = vadd.f32 %v1108, %v1176
        %v1209 = vadd.f32 %v1109, %v1177
        %v1210 = vadd.f32 %v1110, %v1178
        %v1211 = vadd.f32 %v1111, %v1179
        %v1212 = vadd.f32 %v1112, %v1180
        %v1213 = vadd.f32 %v1113, %v1181
        %v1214 = vadd.f32 %v1114, %v1182
        %v1215 = vadd.f32 %v1115, %v1183
        %v1216 = vadd.f32 %v1116, %v1184
        %v1217 = vadd.f32 %v1117, %v1185
        %v1218 = vadd.f32 %v1118, %v1186
        %v1219 = vadd.f32 %v1119, %v1187
        %v1220 = vld [vmem:[%s2] sm:$0xf]
        %v1222 = vsel %vm273, %v1188, 0
        %v1225 = vsel %vm273, %v1189, 0
        %v1228 = vsel %vm273, %v1190, 0
        %v1231 = vsel %vm273, %v1191, 0
        %v1234 = vsel %vm273, %v1192, 0
        %v1237 = vsel %vm273, %v1193, 0
        %v1240 = vsel %vm273, %v1194, 0
        %v1243 = vsel %vm273, %v1195, 0
        %v1246 = vsel %vm273, %v1196, 0
        %v1249 = vsel %vm273, %v1197, 0
        %v1252 = vsel %vm273, %v1198, 0
        %v1255 = vsel %vm273, %v1199, 0
        %v1258 = vsel %vm273, %v1200, 0
        %v1261 = vsel %vm273, %v1201, 0
        %v1264 = vsel %vm273, %v1202, 0
        %v1267 = vsel %vm273, %v1203, 0
        %v1270 = vsel %vm273, %v1204, 0
        %v1273 = vsel %vm273, %v1205, 0
        %v1276 = vsel %vm273, %v1206, 0
        %v1279 = vsel %vm273, %v1207, 0
        %v1282 = vsel %vm273, %v1208, 0
        %v1285 = vsel %vm273, %v1209, 0
        %v1288 = vsel %vm273, %v1210, 0
        %v1291 = vsel %vm273, %v1211, 0
        %v1294 = vsel %vm273, %v1212, 0
        %v1297 = vsel %vm273, %v1213, 0
        %v1300 = vsel %vm273, %v1214, 0
        %v1303 = vsel %vm273, %v1215, 0
        %v1306 = vsel %vm273, %v1216, 0
        %v1309 = vsel %vm273, %v1217, 0
        %v1312 = vsel %vm273, %v1218, 0
        %v1315 = vsel %vm273, %v1219, 0
        %vm1317 = vcmask 1043456
        %v1319 = vsel %vm1317, %v1220, 0
        %1321 = vmatprep.subr.mxu0 0.0
        %1322 = vmatpush1.msra.mxu0 %v1319
        %1323 = vmatprep.subr.mxu0 0.0
        %1324 = vmatpush1.msra.mxu0 0.0
        %1325 = vmatprep.subr.mxu0 0.0
        %1326 = vmatpush1.msra.mxu0 0.0
        %1327 = vmatprep.subr.mxu0 0.0
        %1328 = vmatpush1.msra.mxu0 0.0
        %1329 = vmatprep.subr.mxu0 0.0
        %1330 = vmatpush1.msra.mxu0 0.0
        %1331 = vmatprep.subr.mxu0 0.0
        %1332 = vmatpush1.msra.mxu0 0.0
        %1333 = vmatprep.subr.mxu0 0.0
        %1334 = vmatpush1.msra.mxu0 0.0
        %1335 = vmatprep.subr.mxu0 0.0
        %1336 = vmatpush1.msra.mxu0 0.0
        %1337 = vmatprep.subr.mxu0 0.0
        %1338 = vmatpush1.msra.mxu0 0.0
        %1339 = vmatprep.subr.mxu0 0.0
        %1340 = vmatpush1.msra.mxu0 0.0
        %1341 = vmatprep.subr.mxu0 0.0
        %1342 = vmatpush1.msra.mxu0 0.0
        %1343 = vmatprep.subr.mxu0 0.0
        %1344 = vmatpush1.msra.mxu0 0.0
        %1345 = vmatprep.subr.mxu0 0.0
        %1346 = vmatpush1.msra.mxu0 0.0
        %1347 = vmatprep.subr.mxu0 0.0
        %1348 = vmatpush1.msra.mxu0 0.0
        %1349 = vmatprep.subr.mxu0 0.0
        %1350 = vmatpush1.msra.mxu0 0.0
        %1351 = vmatprep.subr.mxu0 0.0
        %1352 = vmatpush1.msra.mxu0 0.0
        %1353 = vmatprep.subr.mxu0 0.0
        %1354 = vmatpush1.msra.mxu0 0.0
        %1355 = vmatprep.subr.mxu0 0.0
        %1356 = vmatpush1.msra.mxu0 0.0
        %1357 = vmatprep.subr.mxu0 0.0
        %1358 = vmatpush1.msra.mxu0 0.0
        %1359 = vmatprep.subr.mxu0 0.0
        %1360 = vmatpush1.msra.mxu0 0.0
        %1361 = vmatprep.subr.mxu0 0.0
        %1362 = vmatpush1.msra.mxu0 0.0
        %1363 = vmatprep.subr.mxu0 0.0
        %1364 = vmatpush1.msra.mxu0 0.0
        %1365 = vmatprep.subr.mxu0 0.0
        %1366 = vmatpush1.msra.mxu0 0.0
        %1367 = vmatprep.subr.mxu0 0.0
        %1368 = vmatpush1.msra.mxu0 0.0
        %1369 = vmatprep.subr.mxu0 0.0
        %1370 = vmatpush1.msra.mxu0 0.0
        %1371 = vmatprep.subr.mxu0 0.0
        %1372 = vmatpush1.msra.mxu0 0.0
        %1373 = vmatprep.subr.mxu0 0.0
        %1374 = vmatpush1.msra.mxu0 0.0
        %1375 = vmatprep.subr.mxu0 0.0
        %1376 = vmatpush1.msra.mxu0 0.0
        %1377 = vmatprep.subr.mxu0 0.0
        %1378 = vmatpush1.msra.mxu0 0.0
        %1379 = vmatprep.subr.mxu0 0.0
        %1380 = vmatpush1.msra.mxu0 0.0
        %1381 = vmatprep.subr.mxu0 0.0
        %1382 = vmatpush1.msra.mxu0 0.0
        %1383 = vmatprep.subr.mxu0 0.0
        %1384 = vmatpush1.msra.mxu0 0.0
        %1385 = vmatprep.mubr.f32.mxu0 0.0
        %1386 = vmatmul.mubr.f32.gmra.mrb[0].mxu0 %v1222
        %v1387 = vpop.f32.mrb[0].mxu0
        %v1388 = vadd.f32 0.0, %v1387
        %v1389 = vpop.f32.mrb[0].mxu0
        %1390 = vmatprep.mubr.f32.mxu0 0.0
        %1391 = vmatmul.mubr.f32.gmra.mrb[0].mxu0 %v1225
        %v1392 = vpop.f32.mrb[0].mxu0
        %v1393 = vadd.f32 0.0, %v1392
        %v1394 = vpop.f32.mrb[0].mxu0
        %1395 = vmatprep.mubr.f32.mxu0 0.0
        %1396 = vmatmul.mubr.f32.gmra.mrb[0].mxu0 %v1228
        %v1397 = vpop.f32.mrb[0].mxu0
        %v1398 = vadd.f32 0.0, %v1397
        %v1399 = vpop.f32.mrb[0].mxu0
        %1400 = vmatprep.mubr.f32.mxu0 0.0
        %1401 = vmatmul.mubr.f32.gmra.mrb[0].mxu0 %v1231
        %v1402 = vpop.f32.mrb[0].mxu0
        %v1403 = vadd.f32 0.0, %v1402
        %v1404 = vpop.f32.mrb[0].mxu0
        %1405 = vmatprep.mubr.f32.mxu0 0.0
        %1406 = vmatmul.mubr.f32.gmra.mrb[0].mxu0 %v1234
        %v1407 = vpop.f32.mrb[0].mxu0
        %v1408 = vadd.f32 0.0, %v1407
        %v1409 = vpop.f32.mrb[0].mxu0
        %1410 = vmatprep.mubr.f32.mxu0 0.0
        %1411 = vmatmul.mubr.f32.gmra.mrb[0].mxu0 %v1237
        %v1412 = vpop.f32.mrb[0].mxu0
        %v1413 = vadd.f32 0.0, %v1412
        %v1414 = vpop.f32.mrb[0].mxu0
        %1415 = vmatprep.mubr.f32.mxu0 0.0
        %1416 = vmatmul.mubr.f32.gmra.mrb[0].mxu0 %v1240
        %v1417 = vpop.f32.mrb[0].mxu0
        %v1418 = vadd.f32 0.0, %v1417
        %v1419 = vpop.f32.mrb[0].mxu0
        %1420 = vmatprep.mubr.f32.mxu0 0.0
        %1421 = vmatmul.mubr.f32.gmra.mrb[0].mxu0 %v1243
        %v1422 = vpop.f32.mrb[0].mxu0
        %v1423 = vadd.f32 0.0, %v1422
        %v1424 = vpop.f32.mrb[0].mxu0
        %1425 = vmatprep.mubr.f32.mxu0 0.0
        %1426 = vmatmul.mubr.f32.gmra.mrb[0].mxu0 %v1246
        %v1427 = vpop.f32.mrb[0].mxu0
        %v1428 = vadd.f32 0.0, %v1427
        %v1429 = vpop.f32.mrb[0].mxu0
        %1430 = vmatprep.mubr.f32.mxu0 0.0
        %1431 = vmatmul.mubr.f32.gmra.mrb[0].mxu0 %v1249
        %v1432 = vpop.f32.mrb[0].mxu0
        %v1433 = vadd.f32 0.0, %v1432
        %v1434 = vpop.f32.mrb[0].mxu0
        %1435 = vmatprep.mubr.f32.mxu0 0.0
        %1436 = vmatmul.mubr.f32.gmra.mrb[0].mxu0 %v1252
        %v1437 = vpop.f32.mrb[0].mxu0
        %v1438 = vadd.f32 0.0, %v1437
        %v1439 = vpop.f32.mrb[0].mxu0
        %1440 = vmatprep.mubr.f32.mxu0 0.0
        %1441 = vmatmul.mubr.f32.gmra.mrb[0].mxu0 %v1255
        %v1442 = vpop.f32.mrb[0].mxu0
        %v1443 = vadd.f32 0.0, %v1442
        %v1444 = vpop.f32.mrb[0].mxu0
        %1445 = vmatprep.mubr.f32.mxu0 0.0
        %1446 = vmatmul.mubr.f32.gmra.mrb[0].mxu0 %v1258
        %v1447 = vpop.f32.mrb[0].mxu0
        %v1448 = vadd.f32 0.0, %v1447
        %v1449 = vpop.f32.mrb[0].mxu0
        %1450 = vmatprep.mubr.f32.mxu0 0.0
        %1451 = vmatmul.mubr.f32.gmra.mrb[0].mxu0 %v1261
        %v1452 = vpop.f32.mrb[0].mxu0
        %v1453 = vadd.f32 0.0, %v1452
        %v1454 = vpop.f32.mrb[0].mxu0
        %1455 = vmatprep.mubr.f32.mxu0 0.0
        %1456 = vmatmul.mubr.f32.gmra.mrb[0].mxu0 %v1264
        %v1457 = vpop.f32.mrb[0].mxu0
        %v1458 = vadd.f32 0.0, %v1457
        %v1459 = vpop.f32.mrb[0].mxu0
        %1460 = vmatprep.mubr.f32.mxu0 0.0
        %1461 = vmatmul.mubr.f32.gmra.mrb[0].mxu0 %v1267
        %v1462 = vpop.f32.mrb[0].mxu0
        %v1463 = vadd.f32 0.0, %v1462
        %v1464 = vpop.f32.mrb[0].mxu0
        %1465 = vmatprep.mubr.f32.mxu0 0.0
        %1466 = vmatmul.mubr.f32.gmra.mrb[0].mxu0 %v1270
        %v1467 = vpop.f32.mrb[0].mxu0
        %v1468 = vadd.f32 0.0, %v1467
        %v1469 = vpop.f32.mrb[0].mxu0
        %1470 = vmatprep.mubr.f32.mxu0 0.0
        %1471 = vmatmul.mubr.f32.gmra.mrb[0].mxu0 %v1273
        %v1472 = vpop.f32.mrb[0].mxu0
        %v1473 = vadd.f32 0.0, %v1472
        %v1474 = vpop.f32.mrb[0].mxu0
        %1475 = vmatprep.mubr.f32.mxu0 0.0
        %1476 = vmatmul.mubr.f32.gmra.mrb[0].mxu0 %v1276
        %v1477 = vpop.f32.mrb[0].mxu0
        %v1478 = vadd.f32 0.0, %v1477
        %v1479 = vpop.f32.mrb[0].mxu0
        %1480 = vmatprep.mubr.f32.mxu0 0.0
        %1481 = vmatmul.mubr.f32.gmra.mrb[0].mxu0 %v1279
        %v1482 = vpop.f32.mrb[0].mxu0
        %v1483 = vadd.f32 0.0, %v1482
        %v1484 = vpop.f32.mrb[0].mxu0
        %1485 = vmatprep.mubr.f32.mxu0 0.0
        %1486 = vmatmul.mubr.f32.gmra.mrb[0].mxu0 %v1282
        %v1487 = vpop.f32.mrb[0].mxu0
        %v1488 = vadd.f32 0.0, %v1487
        %v1489 = vpop.f32.mrb[0].mxu0
        %1490 = vmatprep.mubr.f32.mxu0 0.0
        %1491 = vmatmul.mubr.f32.gmra.mrb[0].mxu0 %v1285
        %v1492 = vpop.f32.mrb[0].mxu0
        %v1493 = vadd.f32 0.0, %v1492
        %v1494 = vpop.f32.mrb[0].mxu0
        %1495 = vmatprep.mubr.f32.mxu0 0.0
        %1496 = vmatmul.mubr.f32.gmra.mrb[0].mxu0 %v1288
        %v1497 = vpop.f32.mrb[0].mxu0
        %v1498 = vadd.f32 0.0, %v1497
        %v1499 = vpop.f32.mrb[0].mxu0
        %1500 = vmatprep.mubr.f32.mxu0 0.0
        %1501 = vmatmul.mubr.f32.gmra.mrb[0].mxu0 %v1291
        %v1502 = vpop.f32.mrb[0].mxu0
        %v1503 = vadd.f32 0.0, %v1502
        %v1504 = vpop.f32.mrb[0].mxu0
        %1505 = vmatprep.mubr.f32.mxu0 0.0
        %1506 = vmatmul.mubr.f32.gmra.mrb[0].mxu0 %v1294
        %v1507 = vpop.f32.mrb[0].mxu0
        %v1508 = vadd.f32 0.0, %v1507
        %v1509 = vpop.f32.mrb[0].mxu0
        %1510 = vmatprep.mubr.f32.mxu0 0.0
        %1511 = vmatmul.mubr.f32.gmra.mrb[0].mxu0 %v1297
        %v1512 = vpop.f32.mrb[0].mxu0
        %v1513 = vadd.f32 0.0, %v1512
        %v1514 = vpop.f32.mrb[0].mxu0
        %1515 = vmatprep.mubr.f32.mxu0 0.0
        %1516 = vmatmul.mubr.f32.gmra.mrb[0].mxu0 %v1300
        %v1517 = vpop.f32.mrb[0].mxu0
        %v1518 = vadd.f32 0.0, %v1517
        %v1519 = vpop.f32.mrb[0].mxu0
        %1520 = vmatprep.mubr.f32.mxu0 0.0
        %1521 = vmatmul.mubr.f32.gmra.mrb[0].mxu0 %v1303
        %v1522 = vpop.f32.mrb[0].mxu0
        %v1523 = vadd.f32 0.0, %v1522
        %v1524 = vpop.f32.mrb[0].mxu0
        %1525 = vmatprep.mubr.f32.mxu0 0.0
        %1526 = vmatmul.mubr.f32.gmra.mrb[0].mxu0 %v1306
        %v1527 = vpop.f32.mrb[0].mxu0
        %v1528 = vadd.f32 0.0, %v1527
        %v1529 = vpop.f32.mrb[0].mxu0
        %1530 = vmatprep.mubr.f32.mxu0 0.0
        %1531 = vmatmul.mubr.f32.gmra.mrb[0].mxu0 %v1309
        %v1532 = vpop.f32.mrb[0].mxu0
        %v1533 = vadd.f32 0.0, %v1532
        %v1534 = vpop.f32.mrb[0].mxu0
        %1535 = vmatprep.mubr.f32.mxu0 0.0
        %1536 = vmatmul.mubr.f32.gmra.mrb[0].mxu0 %v1312
        %v1537 = vpop.f32.mrb[0].mxu0
        %v1538 = vadd.f32 0.0, %v1537
        %v1539 = vpop.f32.mrb[0].mxu0
        %1540 = vmatprep.mubr.f32.mxu0 0.0
        %1541 = vmatmul.mubr.f32.gmra.mrb[0].mxu0 %v1315
        %v1542 = vpop.f32.mrb[0].mxu0
        %v1543 = vadd.f32 0.0, %v1542
        %v1544 = vpop.f32.mrb[0].mxu0
        %1545 = vdwg.mxu0
        %v1546 = vsel %vm273, %v1388, 0.0
        %v1547 = vsel %vm273, %v1393, 0.0
        %v1548 = vadd.f32 %v1546, %v1547
        %v1549 = vsel %vm273, %v1398, 0.0
        %v1550 = vadd.f32 %v1548, %v1549
        %v1551 = vsel %vm273, %v1403, 0.0
        %v1552 = vadd.f32 %v1550, %v1551
        %v1553 = vsel %vm273, %v1408, 0.0
        %v1554 = vadd.f32 %v1552, %v1553
        %v1555 = vsel %vm273, %v1413, 0.0
        %v1556 = vadd.f32 %v1554, %v1555
        %v1557 = vsel %vm273, %v1418, 0.0
        %v1558 = vadd.f32 %v1556, %v1557
        %v1559 = vsel %vm273, %v1423, 0.0
        %v1560 = vadd.f32 %v1558, %v1559
        %v1561 = vsel %vm273, %v1428, 0.0
        %v1562 = vadd.f32 %v1560, %v1561
        %v1563 = vsel %vm273, %v1433, 0.0
        %v1564 = vadd.f32 %v1562, %v1563
        %v1565 = vsel %vm273, %v1438, 0.0
        %v1566 = vadd.f32 %v1564, %v1565
        %v1567 = vsel %vm273, %v1443, 0.0
        %v1568 = vadd.f32 %v1566, %v1567
        %v1569 = vsel %vm273, %v1448, 0.0
        %v1570 = vadd.f32 %v1568, %v1569
        %v1571 = vsel %vm273, %v1453, 0.0
        %v1572 = vadd.f32 %v1570, %v1571
        %v1573 = vsel %vm273, %v1458, 0.0
        %v1574 = vadd.f32 %v1572, %v1573
        %v1575 = vsel %vm273, %v1463, 0.0
        %v1576 = vadd.f32 %v1574, %v1575
        %v1577 = vsel %vm273, %v1468, 0.0
        %v1578 = vadd.f32 %v1576, %v1577
        %v1579 = vsel %vm273, %v1473, 0.0
        %v1580 = vadd.f32 %v1578, %v1579
        %v1581 = vsel %vm273, %v1478, 0.0
        %v1582 = vadd.f32 %v1580, %v1581
        %v1583 = vsel %vm273, %v1483, 0.0
        %v1584 = vadd.f32 %v1582, %v1583
        %v1585 = vsel %vm273, %v1488, 0.0
        %v1586 = vadd.f32 %v1584, %v1585
        %v1587 = vsel %vm273, %v1493, 0.0
        %v1588 = vadd.f32 %v1586, %v1587
        %v1589 = vsel %vm273, %v1498, 0.0
        %v1590 = vadd.f32 %v1588, %v1589
        %v1591 = vsel %vm273, %v1503, 0.0
        %v1592 = vadd.f32 %v1590, %v1591
        %v1593 = vsel %vm273, %v1508, 0.0
        %v1594 = vadd.f32 %v1592, %v1593
        %v1595 = vsel %vm273, %v1513, 0.0
        %v1596 = vadd.f32 %v1594, %v1595
        %v1597 = vsel %vm273, %v1518, 0.0
        %v1598 = vadd.f32 %v1596, %v1597
        %v1599 = vsel %vm273, %v1523, 0.0
        %v1600 = vadd.f32 %v1598, %v1599
        %v1601 = vsel %vm273, %v1528, 0.0
        %v1602 = vadd.f32 %v1600, %v1601
        %v1603 = vsel %vm273, %v1533, 0.0
        %v1604 = vadd.f32 %v1602, %v1603
        %v1605 = vsel %vm273, %v1538, 0.0
        %v1606 = vadd.f32 %v1604, %v1605
        %v1607 = vsel %vm273, %v1543, 0.0
        %v1608 = vadd.f32 %v1606, %v1607
        %v1609 = vrot.slane %v1608, 4
        %v1610 = vadd.f32 %v1608, %v1609
        %v1611 = vrot.slane %v1610, 2
        %v1612 = vadd.f32 %v1610, %v1611
        %v1613 = vrot.slane %v1612, 1
        %v1614 = vadd.f32 %v1612, %v1613
        %1615 = vst.msk [vmem:[%s198] sm:$0x1] %vm283, %v1614
        %v1616 = vmul.f32 %v1388, %v1388
        %v1617 = vmul.f32 %v1393, %v1393
        %v1618 = vmul.f32 %v1398, %v1398
        %v1619 = vmul.f32 %v1403, %v1403
        %v1620 = vmul.f32 %v1408, %v1408
        %v1621 = vmul.f32 %v1413, %v1413
        %v1622 = vmul.f32 %v1418, %v1418
        %v1623 = vmul.f32 %v1423, %v1423
        %v1624 = vmul.f32 %v1428, %v1428
        %v1625 = vmul.f32 %v1433, %v1433
        %v1626 = vmul.f32 %v1438, %v1438
        %v1627 = vmul.f32 %v1443, %v1443
        %v1628 = vmul.f32 %v1448, %v1448
        %v1629 = vmul.f32 %v1453, %v1453
        %v1630 = vmul.f32 %v1458, %v1458
        %v1631 = vmul.f32 %v1463, %v1463
        %v1632 = vmul.f32 %v1468, %v1468
        %v1633 = vmul.f32 %v1473, %v1473
        %v1634 = vmul.f32 %v1478, %v1478
        %v1635 = vmul.f32 %v1483, %v1483
        %v1636 = vmul.f32 %v1488, %v1488
        %v1637 = vmul.f32 %v1493, %v1493
        %v1638 = vmul.f32 %v1498, %v1498
        %v1639 = vmul.f32 %v1503, %v1503
        %v1640 = vmul.f32 %v1508, %v1508
        %v1641 = vmul.f32 %v1513, %v1513
        %v1642 = vmul.f32 %v1518, %v1518
        %v1643 = vmul.f32 %v1523, %v1523
        %v1644 = vmul.f32 %v1528, %v1528
        %v1645 = vmul.f32 %v1533, %v1533
        %v1646 = vmul.f32 %v1538, %v1538
        %v1647 = vmul.f32 %v1543, %v1543
        %v1648 = vsel %vm273, %v1616, 0.0
        %v1649 = vsel %vm273, %v1617, 0.0
        %v1650 = vadd.f32 %v1648, %v1649
        %v1651 = vsel %vm273, %v1618, 0.0
        %v1652 = vadd.f32 %v1650, %v1651
        %v1653 = vsel %vm273, %v1619, 0.0
        %v1654 = vadd.f32 %v1652, %v1653
        %v1655 = vsel %vm273, %v1620, 0.0
        %v1656 = vadd.f32 %v1654, %v1655
        %v1657 = vsel %vm273, %v1621, 0.0
        %v1658 = vadd.f32 %v1656, %v1657
        %v1659 = vsel %vm273, %v1622, 0.0
        %v1660 = vadd.f32 %v1658, %v1659
        %v1661 = vsel %vm273, %v1623, 0.0
        %v1662 = vadd.f32 %v1660, %v1661
        %v1663 = vsel %vm273, %v1624, 0.0
        %v1664 = vadd.f32 %v1662, %v1663
        %v1665 = vsel %vm273, %v1625, 0.0
        %v1666 = vadd.f32 %v1664, %v1665
        %v1667 = vsel %vm273, %v1626, 0.0
        %v1668 = vadd.f32 %v1666, %v1667
        %v1669 = vsel %vm273, %v1627, 0.0
        %v1670 = vadd.f32 %v1668, %v1669
        %v1671 = vsel %vm273, %v1628, 0.0
        %v1672 = vadd.f32 %v1670, %v1671
        %v1673 = vsel %vm273, %v1629, 0.0
        %v1674 = vadd.f32 %v1672, %v1673
        %v1675 = vsel %vm273, %v1630, 0.0
        %v1676 = vadd.f32 %v1674, %v1675
        %v1677 = vsel %vm273, %v1631, 0.0
        %v1678 = vadd.f32 %v1676, %v1677
        %v1679 = vsel %vm273, %v1632, 0.0
        %v1680 = vadd.f32 %v1678, %v1679
        %v1681 = vsel %vm273, %v1633, 0.0
        %v1682 = vadd.f32 %v1680, %v1681
        %v1683 = vsel %vm273, %v1634, 0.0
        %v1684 = vadd.f32 %v1682, %v1683
        %v1685 = vsel %vm273, %v1635, 0.0
        %v1686 = vadd.f32 %v1684, %v1685
        %v1687 = vsel %vm273, %v1636, 0.0
        %v1688 = vadd.f32 %v1686, %v1687
        %v1689 = vsel %vm273, %v1637, 0.0
        %v1690 = vadd.f32 %v1688, %v1689
        %v1691 = vsel %vm273, %v1638, 0.0
        %v1692 = vadd.f32 %v1690, %v1691
        %v1693 = vsel %vm273, %v1639, 0.0
        %v1694 = vadd.f32 %v1692, %v1693
        %v1695 = vsel %vm273, %v1640, 0.0
        %v1696 = vadd.f32 %v1694, %v1695
        %v1697 = vsel %vm273, %v1641, 0.0
        %v1698 = vadd.f32 %v1696, %v1697
        %v1699 = vsel %vm273, %v1642, 0.0
        %v1700 = vadd.f32 %v1698, %v1699
        %v1701 = vsel %vm273, %v1643, 0.0
        %v1702 = vadd.f32 %v1700, %v1701
        %v1703 = vsel %vm273, %v1644, 0.0
        %v1704 = vadd.f32 %v1702, %v1703
        %v1705 = vsel %vm273, %v1645, 0.0
        %v1706 = vadd.f32 %v1704, %v1705
        %v1707 = vsel %vm273, %v1646, 0.0
        %v1708 = vadd.f32 %v1706, %v1707
        %v1709 = vsel %vm273, %v1647, 0.0
        %v1710 = vadd.f32 %v1708, %v1709
        %v1711 = vrot.slane %v1710, 4
        %v1712 = vadd.f32 %v1710, %v1711
        %v1713 = vrot.slane %v1712, 2
        %v1714 = vadd.f32 %v1712, %v1713
        %v1715 = vrot.slane %v1714, 1
        %v1716 = vadd.f32 %v1714, %v1715
        %1717 = vst.msk [vmem:[%s198 + $0x1] sm:$0x1] %vm283, %v1716
        %1718 = vst.msk [vmem:[%s208] sm:$0xff] %vm273, %v1388
        %1719 = vst.msk [vmem:[%s208 + $0x8] sm:$0xff] %vm273, %v1393
        %1720 = vst.msk [vmem:[%s208 + $0x10] sm:$0xff] %vm273, %v1398
        %1721 = vst.msk [vmem:[%s208 + $0x18] sm:$0xff] %vm273, %v1403
        %1722 = vst.msk [vmem:[%s208 + $0x20] sm:$0xff] %vm273, %v1408
        %1723 = vst.msk [vmem:[%s208 + $0x28] sm:$0xff] %vm273, %v1413
        %1724 = vst.msk [vmem:[%s208 + $0x30] sm:$0xff] %vm273, %v1418
        %1725 = vst.msk [vmem:[%s208 + $0x38] sm:$0xff] %vm273, %v1423
        %1726 = vst.msk [vmem:[%s208 + $0x40] sm:$0xff] %vm273, %v1428
        %1727 = vst.msk [vmem:[%s208 + $0x48] sm:$0xff] %vm273, %v1433
        %1728 = vst.msk [vmem:[%s208 + $0x50] sm:$0xff] %vm273, %v1438
        %1729 = vst.msk [vmem:[%s208 + $0x58] sm:$0xff] %vm273, %v1443
        %1730 = vst.msk [vmem:[%s208 + $0x60] sm:$0xff] %vm273, %v1448
        %1731 = vst.msk [vmem:[%s208 + $0x68] sm:$0xff] %vm273, %v1453
        %1732 = vst.msk [vmem:[%s208 + $0x70] sm:$0xff] %vm273, %v1458
        %1733 = vst.msk [vmem:[%s208 + $0x78] sm:$0xff] %vm273, %v1463
        %1734 = vst.msk [vmem:[%s208 + $0x80] sm:$0xff] %vm273, %v1468
        %1735 = vst.msk [vmem:[%s208 + $0x88] sm:$0xff] %vm273, %v1473
        %1736 = vst.msk [vmem:[%s208 + $0x90] sm:$0xff] %vm273, %v1478
        %1737 = vst.msk [vmem:[%s208 + $0x98] sm:$0xff] %vm273, %v1483
        %1738 = vst.msk [vmem:[%s208 + $0xa0] sm:$0xff] %vm273, %v1488
        %1739 = vst.msk [vmem:[%s208 + $0xa8] sm:$0xff] %vm273, %v1493
        %1740 = vst.msk [vmem:[%s208 + $0xb0] sm:$0xff] %vm273, %v1498
        %1741 = vst.msk [vmem:[%s208 + $0xb8] sm:$0xff] %vm273, %v1503
        %1742 = vst.msk [vmem:[%s208 + $0xc0] sm:$0xff] %vm273, %v1508
        %1743 = vst.msk [vmem:[%s208 + $0xc8] sm:$0xff] %vm273, %v1513
        %1744 = vst.msk [vmem:[%s208 + $0xd0] sm:$0xff] %vm273, %v1518
        %1745 = vst.msk [vmem:[%s208 + $0xd8] sm:$0xff] %vm273, %v1523
        %1746 = vst.msk [vmem:[%s208 + $0xe0] sm:$0xff] %vm273, %v1528
        %1747 = vst.msk [vmem:[%s208 + $0xe8] sm:$0xff] %vm273, %v1533
        %1748 = vst.msk [vmem:[%s208 + $0xf0] sm:$0xff] %vm273, %v1538
        %1749 = vst.msk [vmem:[%s208 + $0xf8] sm:$0xff] %vm273, %v1543
        %p1750 = scmp.lt.s32.totalorder %s19, 1
        %s1751 = scalar_select %p1750, %s19, 1
        %s1752 = smul.addr %s1751, 32
        %s1753 = smul.addr %s1752, 8
        %s1754 = scalar_lea.vmem %s3, %s1753
        %s1755 = sand.u32 %s121, 1
        %s1756 = scalar_lea.sflag [#allocation4], %s1755
        %s1757 = sand.u32 %s121, 1
        %s1758 = smul.addr %s1757, 2
        %s1759 = scalar_lea.vmem [#allocation3], %s1758
        // Predicated region
        $region33: #{tpu_custom_call.1} parent=31 // pred_check
          %p1760 = pneg %p105
        $region34: #{tpu_custom_call.1} parent=31 // pred_check_branch
          %1762 = sbr.rel (%p1760) target = $region36
        $region35: #{tpu_custom_call.1} parent=31 // pred_region
          _
        $region36: #{tpu_custom_call.1} parent=31 // pred_fallthru
          _
        // Predicated region
        $region37: #{tpu_custom_call.1} parent=31 // pred_check
          %p1763 = pneg %p131
        $region38: #{tpu_custom_call.1} parent=31 // pred_check_branch
          %1765 = sbr.rel (%p1763) target = $region40
        $region39: #{tpu_custom_call.1} parent=31 // pred_region
          %s1767 = ssub.s32 32, 32
          %1768 = vsyncadd %s1756, %s1767
          %s1769 = smul.addr %s19, 32
          %s1770 = scalar_lea.hbm %s4, %s1769
          %s1772 = sshll.u32 %s1759, 4
          %s1773 = int_to_ptr.vmem [resolvable:$true] %s1772
          %1775 = dma.vmem_to_hbm [thread:$0]  %s1773, 32, %s1770, %s1756
        $region40: #{tpu_custom_call.1} parent=31 // pred_fallthru
          _
      $region32: #{tpu_custom_call.1} parent=5 // pred_fallthru
        _
      %p1776 = scmp.le.s32.totalorder 2, %s14
      // Predicated region
      $region41: #{tpu_custom_call.1} parent=5 // pred_check
        %p1777 = pneg %p1776
      $region42: #{tpu_custom_call.1} parent=5 // pred_check_branch
        %1779 = sbr.rel (%p1777) target = $region44
      $region43: #{tpu_custom_call.1} parent=5 // pred_region
        %s1780 = ssub.s32 %s14, 2
        // Predicated region
        $region45: #{tpu_custom_call.1} parent=43 // pred_check
          %p1781 = pneg %p111
        $region46: #{tpu_custom_call.1} parent=43 // pred_check_branch
          %1783 = sbr.rel (%p1781) target = $region48
        $region47: #{tpu_custom_call.1} parent=43 // pred_region
          %p1784 = scmp.lt.s32.totalorder %s20, 1
          %s1785 = scalar_select %p1784, %s20, 1
          %s1786 = smul.addr %s1785, 32
          %s1787 = smul.addr %s1786, 8
          %s1788 = scalar_lea.vmem %s3, %s1787
        $region48: #{tpu_custom_call.1} parent=43 // pred_fallthru
          _
        // Predicated region
        $region49: #{tpu_custom_call.1} parent=43 // pred_check
          %p1789 = pneg %p137
        $region50: #{tpu_custom_call.1} parent=43 // pred_check_branch
          %1791 = sbr.rel (%p1789) target = $region52
        $region51: #{tpu_custom_call.1} parent=43 // pred_region
          %s1792 = sand.u32 %s122, 1
          %s1793 = scalar_lea.sflag [#allocation4], %s1792
          %s1794 = sand.u32 %s122, 1
          %s1795 = smul.addr %s1794, 2
          %s1796 = scalar_lea.vmem [#allocation3], %s1795
          %1797 = dma.done %s1793, 32
        $region52: #{tpu_custom_call.1} parent=43 // pred_fallthru
          _
      $region44: #{tpu_custom_call.1} parent=5 // pred_fallthru
        _
    $region6: #{tpu_custom_call.1} parent=1 // loop_footer
      %s18 = sadd.s32 1, %s14
    $region7: #{tpu_custom_call.1} parent=1 // loop_footer_branch
      %13 = sbr.rel target = $region3
    $region8: #{tpu_custom_call.1} parent=1 // loop_exit
      _
    %1798 = vsyncpa [#allocation4], 1
    %s1799 = scalar_lea.sflag [#allocation4], 1
    %1800 = vsyncpa %s1799, 1

</llo_original>
